<compile_context>
chip_gen: v5e
topology: v5e:2x2
jax: 0.10.0
libtpu: 0.0.40
codegen_flags: <defaults>
</compile_context>

<pallas_src>
import numpy as np
import jax
import jax.numpy as jnp
from jax import lax
from jax.experimental import pallas as pl
from jax.experimental.pallas import tpu as pltpu


# ----------------------------- trace-time helpers -----------------------------

def _bn_fold(gamma, beta, mean, var, eps=1e-5, conv_bias=None):
    scale = gamma / jnp.sqrt(var + eps)
    bias = beta - mean * scale
    if conv_bias is not None:
        bias = bias + conv_bias * scale
    return scale, bias


def _pick_batch_tile(N, rows_per_img, target_rows=2048):
    """Largest batch tile Nb that divides N, keeps >=2 grid steps (v7x has 2
    TensorCores) and keeps the per-step matmul M dimension reasonable."""
    nb_best = 1
    for nb in range(1, N + 1):
        if N % nb:
            continue
        if nb > 1 and nb * rows_per_img > target_rows:
            continue
        if N >= 2 and N // nb < 2:
            continue
        if nb != N and (nb * rows_per_img) % 8 != 0:     # BlockSpec sublane rule
            continue
        nb_best = nb
    return nb_best


# ----------------------------- fused Pallas kernel -----------------------------

def _make_fused_kernel(*, Nb, s2, Npix, Cg, base, R_in, taps):
    """One grid step = Nb images.  Everything lives in 'padded-row' layout:
    Npix = Hs*Wp rows per (image, phase); the last 2 pixels of each image row
    are zero padding so the 3x3 taps become contiguous shifted slices."""
    tail = R_in - (base + Npix)

    def kernel(xph_ref, mask_ref, w1c_ref, w2_ref, w3_ref,
               b1_ref, b2_ref, bsc_ref, b3_ref, out_ref, canv_ref):
        # ---- zero only the canvas pad regions (interior is overwritten below) ----
        for nb in range(Nb):
            for pi in range(s2):
                canv_ref[nb, pi, :base, :] = jnp.zeros((base, Cg), canv_ref.dtype)
                if tail > 0:
                    canv_ref[nb, pi, base + Npix:, :] = jnp.zeros((tail, Cg),
                                                                  canv_ref.dtype)

        # ---- conv1 (1x1+BN+ReLU) fused with the shortcut 1x1+BN: ONE matmul ----
        mm = jnp.dot(xph_ref[...], w1c_ref[...], preferred_element_type=jnp.float32)
        # pad columns must stay exactly zero in the canvas (they are the 3x3
        # conv's zero padding), so mask them after bias + ReLU.
        y1 = (jnp.maximum(mm[:, :Cg] + b1_ref[...], 0.0) * mask_ref[...]
              ).astype(canv_ref.dtype)

        # one contiguous, 8-row-aligned store per (image, phase) — no per-row scatter
        for nb in range(Nb):
            for pi in range(s2):
                r0 = (nb * s2 + pi) * Npix
                canv_ref[nb, pi, base:base + Npix, :] = y1[r0:r0 + Npix, :]

        for nb in range(Nb):
            # shortcut comes from the phase-(0,0) columns of the fused matmul
            r0 = nb * s2 * Npix
            sc = mm[r0:r0 + Npix, Cg:] + bsc_ref[...]                 # (Npix, 2Cg)

            # ---- conv2: grouped 3x3 stride-s as 9 shifted contiguous matmuls ----
            # TODO(synk): tile the Npix axis / accumulate in a VMEM scratch at
            # production sizes (Npix*Cg*4B ~ vreg file) to avoid register spills.
            acc = jnp.zeros((Npix, Cg), jnp.float32)
            for t, (pi, start) in enumerate(taps):
                tap = canv_ref[nb, pi, start:start + Npix, :]          # bf16
                acc = acc + jnp.dot(tap, w2_ref[t],
                                    preferred_element_type=jnp.float32)
            y2 = jnp.maximum(acc + b2_ref[...], 0.0).astype(jnp.bfloat16)

            # ---- conv3 (1x1 + bias + BN) + residual add + final ReLU ----
            y3 = jnp.dot(y2, w3_ref[...],
                         preferred_element_type=jnp.float32) + b3_ref[...]
            res = jnp.maximum(y3 + sc, 0.0)                            # (Npix, 2Cg)
            # single contiguous block store per image; pad columns are stripped in
            # the wrapper where the slice fuses with the NCHW transpose.
            out_ref[nb] = res.astype(out_ref.dtype)

    return kernel


# ----------------------------- forward wrapper -----------------------------

def resnext_block_forward(x_nchw, p, *, cardinality, group_depth, stride):
    N, Cin, H, W = x_nchw.shape
    gd = group_depth
    Cg = cardinality * gd
    s = stride
    assert H % s == 0 and W % s == 0, "spatial dims must be divisible by stride"
    Hs, Ws = H // s, W // s
    assert ((H + 2 - 3) // s + 1, (W + 2 - 3) // s + 1) == (Hs, Ws)
    s2 = s * s
    Wp = Ws + 2                      # padded row length (incl. zero pad pixels)
    Npix = Hs * Wp                   # rows per (image, phase) in padded-row layout

    # ---------------- fold BN into the conv weights (trace time) ----------------
    s1, b1 = _bn_fold(p["bn1_g"], p["bn1_b"], p["bn1_m"], p["bn1_v"])
    s2c, b2 = _bn_fold(p["bn2_g"], p["bn2_b"], p["bn2_m"], p["bn2_v"])
    s3, b3 = _bn_fold(p["bn3_g"], p["bn3_b"], p["bn3_m"], p["bn3_v"], conv_bias=p["b3"])
    ssc, bs = _bn_fold(p["bns_g"], p["bns_b"], p["bns_m"], p["bns_v"])

    w1f = jnp.transpose(p["w1"][:, :, 0, 0], (1, 0)) * s1[None, :]      # (Cin, Cg)
    wsf = jnp.transpose(p["ws"][:, :, 0, 0], (1, 0)) * ssc[None, :]     # (Cin, 2Cg)
    w1cat = jnp.concatenate([w1f, wsf], axis=1).astype(jnp.bfloat16)    # (Cin, 3Cg)
    w3f = (jnp.transpose(p["w3"][:, :, 0, 0], (1, 0)) * s3[None, :]).astype(jnp.bfloat16)

    # grouped 3x3 -> block-diagonal (Cg, Cg) matrix per tap, BN2 scale folded.
    # TODO(synk): for large cardinality (block-diag mostly zeros) replace with a
    #             per-group contraction instead of a dense (Cg, Cg) matmul per tap.
    w2g = p["w2"].reshape(cardinality, gd, gd, 3, 3)     # (g, o_l, i_l, ky, kx)
    pad0 = (-(Wp + 1)) % 8           # top slack so the conv1 canvas store is 8-aligned
    base = pad0 + Wp + 1             # canvas row where the phase interior starts
    taps, tap_ws = [], []
    for ky in range(3):
        dy, py = divmod(ky - 1, s)                       # phase / unit shift along H
        for kx in range(3):
            dx, px = divmod(kx - 1, s)                   # phase / unit shift along W
            taps.append((py * s + px, pad0 + (dy + 1) * Wp + (dx + 1)))
            m = jnp.zeros((Cg, Cg), jnp.float32)
            for g in range(cardinality):
                m = m.at[g * gd:(g + 1) * gd, g * gd:(g + 1) * gd].set(
                    jnp.transpose(w2g[g, :, :, ky, kx], (1, 0)))        # (i_l, o_l)
            tap_ws.append(m * s2c[None, :])
    w2f = jnp.stack(tap_ws, axis=0).astype(jnp.bfloat16)                # (9, Cg, Cg)

    R_in = max(base + Npix, max(t for _, t in taps) + Npix)
    R_in = -(-R_in // 8) * 8

    b1r = b1.reshape(1, Cg).astype(jnp.float32)
    b2r = b2.reshape(1, Cg).astype(jnp.float32)
    bsr = bs.reshape(1, 2 * Cg).astype(jnp.float32)
    b3r = b3.reshape(1, 2 * Cg).astype(jnp.float32)

    # --------- host prologue: ONE fused reshape/transpose/pad/cast pass ---------
    # NCHW -> (N, py, px, Hs, Ws, Cin) stride phases -> pad each row to Wp -> flat.
    # TODO(synk): an in-kernel stride-phase decomposition would remove this pass
    #             entirely; kept host-side (single XLA fusion) for robust lowering.
    x6 = x_nchw.reshape(N, Cin, Hs, s, Ws, s)
    xph = jnp.transpose(x6, (0, 3, 5, 2, 4, 1))
    xph = jnp.pad(xph, ((0, 0),) * 4 + ((0, Wp - Ws), (0, 0)))
    xph = xph.reshape(N * s2 * Npix, Cin).astype(jnp.bfloat16)

    rows_per_img = s2 * Npix
    Nb = _pick_batch_tile(N, rows_per_img)
    Mb = Nb * rows_per_img
    assert N % Nb == 0 and (Mb % 8 == 0 or Nb == N)

    # valid-pixel mask (1.0 on real pixels, 0.0 on the 2 pad pixels per row)
    mask = jnp.broadcast_to((jnp.arange(Wp) < Ws).astype(jnp.float32),
                            (Nb * s2 * Hs, Wp)).reshape(Mb, 1)

    kernel = _make_fused_kernel(Nb=Nb, s2=s2, Npix=Npix, Cg=Cg,
                                base=base, R_in=R_in, taps=taps)

    # VMEM budget: double-buffered blocks + canvas scratch, with headroom.
    est = 2 * (Mb * Cin * 2 + Mb * 4 + Nb * Npix * 2 * Cg * 4
               + (Cin * 3 * Cg + 9 * Cg * Cg + Cg * 2 * Cg) * 2 + 6 * Cg * 4)
    est += Nb * s2 * R_in * Cg * 2
    vmem_limit = int(min(max(4 * est, 32 * 2 ** 20), 48 * 2 ** 20))

    out_flat = pl.pallas_call(
        kernel,
        out_shape=jax.ShapeDtypeStruct((N, Npix, 2 * Cg), jnp.float32),
        grid=(N // Nb,),
        in_specs=[
            pl.BlockSpec((Mb, Cin), lambda n: (n, 0)),
            pl.BlockSpec((Mb, 1), lambda n: (0, 0)),
            pl.BlockSpec((Cin, 3 * Cg), lambda n: (0, 0)),
            pl.BlockSpec((9, Cg, Cg), lambda n: (0, 0, 0)),
            pl.BlockSpec((Cg, 2 * Cg), lambda n: (0, 0)),
            pl.BlockSpec((1, Cg), lambda n: (0, 0)),
            pl.BlockSpec((1, Cg), lambda n: (0, 0)),
            pl.BlockSpec((1, 2 * Cg), lambda n: (0, 0)),
            pl.BlockSpec((1, 2 * Cg), lambda n: (0, 0)),
        ],
        out_specs=pl.BlockSpec((Nb, Npix, 2 * Cg), lambda n: (n, 0, 0)),
        scratch_shapes=[pltpu.VMEM((Nb, s2, R_in, Cg), jnp.bfloat16)],
        compiler_params=pltpu.CompilerParams(
            dimension_semantics=("parallel",),
            vmem_limit_bytes=vmem_limit),
    )(xph, mask, w1cat, w2f, w3f, b1r, b2r, bsr, b3r)

    # strip pad columns and return NCHW for parity with the PyTorch module.
    # TODO(synk): when chaining blocks keep NHWC / bf16 and drop this transpose.
    out_nhwc = out_flat.reshape(N, Hs, Wp, 2 * Cg)[:, :, :Ws, :]
    return jnp.transpose(out_nhwc, (0, 3, 1, 2))


# ----------------------------- reference (plain JAX, f32) -----------------------------

def reference_forward(x, p, *, cardinality, group_depth, stride, eps=1e-5):
    dn = ("NCHW", "OIHW", "NCHW")

    def bn(y, g, b, m, v):
        return ((y - m[None, :, None, None]) / jnp.sqrt(v + eps)[None, :, None, None]
                * g[None, :, None, None] + b[None, :, None, None])

    y = lax.conv_general_dilated(x, p["w1"], (1, 1), "VALID", dimension_numbers=dn)
    y = jax.nn.relu(bn(y, p["bn1_g"], p["bn1_b"], p["bn1_m"], p["bn1_v"]))
    y = lax.conv_general_dilated(y, p["w2"], (stride, stride), ((1, 1), (1, 1)),
                                 dimension_numbers=dn, feature_group_count=cardinality)
    y = jax.nn.relu(bn(y, p["bn2_g"], p["bn2_b"], p["bn2_m"], p["bn2_v"]))
    y = lax.conv_general_dilated(y, p["w3"], (1, 1), "VALID", dimension_numbers=dn)
    y = y + p["b3"][None, :, None, None]
    y = bn(y, p["bn3_g"], p["bn3_b"], p["bn3_m"], p["bn3_v"])
    sc = lax.conv_general_dilated(x, p["ws"], (stride, stride), "VALID", dimension_numbers=dn)
    sc = bn(sc, p["bns_g"], p["bns_b"], p["bns_m"], p["bns_v"])
    return jax.nn.relu(y + sc)


# ----------------------------- main -----------------------------

def make_params(key, in_chnls, cardinality, group_depth):
    Cg = cardinality * group_depth
    ks = list(jax.random.split(key, 24))

    def nrm(k, shape, s=0.1):
        return s * jax.random.normal(k, shape, jnp.float32)

    def bn_params(k1, k2, k3, k4, c):
        return (1.0 + nrm(k1, (c,)), nrm(k2, (c,)), nrm(k3, (c,)),
                0.5 + jnp.abs(nrm(k4, (c,))))

    p = {}
    p["w1"] = nrm(ks[0], (Cg, in_chnls, 1, 1))
    p["bn1_g"], p["bn1_b"], p["bn1_m"], p["bn1_v"] = bn_params(ks[1], ks[2], ks[3], ks[4], Cg)
    p["w2"] = nrm(ks[5], (Cg, group_depth, 3, 3))
    p["bn2_g"], p["bn2_b"], p["bn2_m"], p["bn2_v"] = bn_params(ks[6], ks[7], ks[8], ks[9], Cg)
    p["w3"] = nrm(ks[10], (2 * Cg, Cg, 1, 1))
    p["b3"] = nrm(ks[11], (2 * Cg,))
    p["bn3_g"], p["bn3_b"], p["bn3_m"], p["bn3_v"] = bn_params(ks[12], ks[13], ks[14], ks[15], 2 * Cg)
    p["ws"] = nrm(ks[16], (2 * Cg, in_chnls, 1, 1))
    p["bns_g"], p["bns_b"], p["bns_m"], p["bns_v"] = bn_params(ks[17], ks[18], ks[19], ks[20], 2 * Cg)
    return p


if __name__ == "__main__":
    # ResNeXt_Block(in_chnls=8, cardinality=4, group_depth=4, stride=2, is_se=False)
    N, in_chnls, H, W = 2, 8, 8, 8
    cardinality, group_depth, stride = 4, 4, 2

    key = jax.random.PRNGKey(0)
    kx, kp = jax.random.split(key)
    x = jax.random.normal(kx, (N, in_chnls, H, W), jnp.float32)
    params = make_params(kp, in_chnls, cardinality, group_depth)

    out = resnext_block_forward(x, params, cardinality=cardinality,
                                group_depth=group_depth, stride=stride)
    out = jax.block_until_ready(out)

    ref = reference_forward(x, params, cardinality=cardinality,
                            group_depth=group_depth, stride=stride)
    ref = jax.block_until_ready(ref)

    assert out.shape == ref.shape, (out.shape, ref.shape)
    # bf16 MXU operands -> relaxed tolerance vs the f32 reference.
    np.testing.assert_allclose(np.asarray(out), np.asarray(ref), rtol=2e-2, atol=2e-2)
    print("KERNEL_OK")
</pallas_src>

<mosaic_0001>
module attributes {stable_mosaic.version = 11 : i64} {
  func.func @kernel(%arg0: i32, %arg1: memref<96x8xbf16, #tpu.memory_space<vmem>>, %arg2: memref<96x1xf32, #tpu.memory_space<vmem>>, %arg3: memref<8x48xbf16, #tpu.memory_space<vmem>>, %arg4: memref<9x16x16xbf16, #tpu.memory_space<vmem>>, %arg5: memref<16x32xbf16, #tpu.memory_space<vmem>>, %arg6: memref<1x16xf32, #tpu.memory_space<vmem>>, %arg7: memref<1x16xf32, #tpu.memory_space<vmem>>, %arg8: memref<1x32xf32, #tpu.memory_space<vmem>>, %arg9: memref<1x32xf32, #tpu.memory_space<vmem>>, %arg10: memref<1x24x32xf32, #tpu.memory_space<vmem>>, %arg11: memref<1x4x32x16xbf16, #tpu.memory_space<vmem>>) attributes {dimension_semantics = [#tpu.dimension_semantics<parallel>], iteration_bounds = array<i64: 2>, scalar_prefetch = 0 : i64, scratch_operands = 1 : i64, tpu.core_type = #tpu.core_type<tc>, window_params = [{transform_indices = @transform_0, window_bounds = array<i64: 96, 8>}, {pipeline_mode = #tpu.pipeline_mode<synchronous>, transform_indices = @transform_1, window_bounds = array<i64: 96, 1>}, {pipeline_mode = #tpu.pipeline_mode<synchronous>, transform_indices = @transform_2, window_bounds = array<i64: 8, 48>}, {pipeline_mode = #tpu.pipeline_mode<synchronous>, transform_indices = @transform_3, window_bounds = array<i64: 9, 16, 16>}, {pipeline_mode = #tpu.pipeline_mode<synchronous>, transform_indices = @transform_4, window_bounds = array<i64: 16, 32>}, {pipeline_mode = #tpu.pipeline_mode<synchronous>, transform_indices = @transform_5, window_bounds = array<i64: 1, 16>}, {pipeline_mode = #tpu.pipeline_mode<synchronous>, transform_indices = @transform_6, window_bounds = array<i64: 1, 16>}, {pipeline_mode = #tpu.pipeline_mode<synchronous>, transform_indices = @transform_7, window_bounds = array<i64: 1, 32>}, {pipeline_mode = #tpu.pipeline_mode<synchronous>, transform_indices = @transform_8, window_bounds = array<i64: 1, 32>}, {transform_indices = @transform_9, window_bounds = array<i64: 1, 24, 32>}]} {
    %cst = arith.constant 0.000000e+00 : bf16
    %0 = vector.broadcast %cst : bf16 to vector<8x16xbf16>
    %c0 = arith.constant 0 : index
    %c0_0 = arith.constant 0 : index
    %c0_1 = arith.constant 0 : index
    %c0_2 = arith.constant 0 : index
    %1 = vector.load %arg11[%c0, %c0_0, %c0_1, %c0_2] : memref<1x4x32x16xbf16, #tpu.memory_space<vmem>>, vector<1x1x8x16xbf16>
    %2 = vector.shape_cast %1 : vector<1x1x8x16xbf16> to vector<8x16xbf16>
    %3 = vector.shape_cast %0 : vector<8x16xbf16> to vector<1x1x8x16xbf16>
    tpu.vector_store %arg11[%c0, %c0_0, %c0_1, %c0_2], %3 {strides = array<i32>} : memref<1x4x32x16xbf16, #tpu.memory_space<vmem>>, vector<1x1x8x16xbf16>,
    %cst_3 = arith.constant 0.000000e+00 : bf16
    %4 = vector.broadcast %cst_3 : bf16 to vector<8x16xbf16>
    %c0_4 = arith.constant 0 : index
    %c1 = arith.constant 1 : index
    %c0_5 = arith.constant 0 : index
    %c0_6 = arith.constant 0 : index
    %5 = vector.load %arg11[%c0_4, %c1, %c0_5, %c0_6] : memref<1x4x32x16xbf16, #tpu.memory_space<vmem>>, vector<1x1x8x16xbf16>
    %6 = vector.shape_cast %5 : vector<1x1x8x16xbf16> to vector<8x16xbf16>
    %7 = vector.shape_cast %4 : vector<8x16xbf16> to vector<1x1x8x16xbf16>
    tpu.vector_store %arg11[%c0_4, %c1, %c0_5, %c0_6], %7 {strides = array<i32>} : memref<1x4x32x16xbf16, #tpu.memory_space<vmem>>, vector<1x1x8x16xbf16>,
    %cst_7 = arith.constant 0.000000e+00 : bf16
    %8 = vector.broadcast %cst_7 : bf16 to vector<8x16xbf16>
    %c0_8 = arith.constant 0 : index
    %c2 = arith.constant 2 : index
    %c0_9 = arith.constant 0 : index
    %c0_10 = arith.constant 0 : index
    %9 = vector.load %arg11[%c0_8, %c2, %c0_9, %c0_10] : memref<1x4x32x16xbf16, #tpu.memory_space<vmem>>, vector<1x1x8x16xbf16>
    %10 = vector.shape_cast %9 : vector<1x1x8x16xbf16> to vector<8x16xbf16>
    %11 = vector.shape_cast %8 : vector<8x16xbf16> to vector<1x1x8x16xbf16>
    tpu.vector_store %arg11[%c0_8, %c2, %c0_9, %c0_10], %11 {strides = array<i32>} : memref<1x4x32x16xbf16, #tpu.memory_space<vmem>>, vector<1x1x8x16xbf16>,
    %cst_11 = arith.constant 0.000000e+00 : bf16
    %12 = vector.broadcast %cst_11 : bf16 to vector<8x16xbf16>
    %c0_12 = arith.constant 0 : index
    %c3 = arith.constant 3 : index
    %c0_13 = arith.constant 0 : index
    %c0_14 = arith.constant 0 : index
    %13 = vector.load %arg11[%c0_12, %c3, %c0_13, %c0_14] : memref<1x4x32x16xbf16, #tpu.memory_space<vmem>>, vector<1x1x8x16xbf16>
    %14 = vector.shape_cast %13 : vector<1x1x8x16xbf16> to vector<8x16xbf16>
    %15 = vector.shape_cast %12 : vector<8x16xbf16> to vector<1x1x8x16xbf16>
    tpu.vector_store %arg11[%c0_12, %c3, %c0_13, %c0_14], %15 {strides = array<i32>} : memref<1x4x32x16xbf16, #tpu.memory_space<vmem>>, vector<1x1x8x16xbf16>,
    %c0_15 = arith.constant 0 : index
    %c0_16 = arith.constant 0 : index
    %16 = vector.load %arg1[%c0_15, %c0_16] : memref<96x8xbf16, #tpu.memory_space<vmem>>, vector<96x8xbf16>
    %c0_17 = arith.constant 0 : index
    %c0_18 = arith.constant 0 : index
    %17 = vector.load %arg3[%c0_17, %c0_18] : memref<8x48xbf16, #tpu.memory_space<vmem>>, vector<8x48xbf16>
    %cst_19 = arith.constant dense<0.000000e+00> : vector<96x48xf32>
    %18 = tpu.matmul %16, %17, %cst_19 {dimension_numbers = #tpu.dot_dimension_numbers<[1], [0], [0], [1], [0, 0, 1, 1], [], []>} : vector<96x8xbf16>, vector<8x48xbf16>, vector<96x48xf32> -> vector<96x48xf32>
    %19 = vector.extract_strided_slice %18 {offsets = [0, 0], sizes = [96, 16], strides = [1, 1]} : vector<96x48xf32> to vector<96x16xf32>
    %c0_20 = arith.constant 0 : index
    %c0_21 = arith.constant 0 : index
    %20 = vector.load %arg6[%c0_20, %c0_21] : memref<1x16xf32, #tpu.memory_space<vmem>>, vector<1x16xf32>
    %21 = vector.broadcast %20 : vector<1x16xf32> to vector<96x16xf32>
    %22 = arith.addf %19, %21 : vector<96x16xf32>
    %cst_22 = arith.constant 0.000000e+00 : f32
    %23 = vector.broadcast %cst_22 : f32 to vector<96x16xf32>
    %24 = arith.maximumf %22, %23 : vector<96x16xf32>
    %c0_23 = arith.constant 0 : index
    %c0_24 = arith.constant 0 : index
    %25 = vector.load %arg2[%c0_23, %c0_24] : memref<96x1xf32, #tpu.memory_space<vmem>>, vector<96x1xf32>
    %26 = vector.broadcast %25 : vector<96x1xf32> to vector<96x16xf32>
    %27 = arith.mulf %24, %26 : vector<96x16xf32>
    %28 = arith.truncf %27 : vector<96x16xf32> to vector<96x16xbf16>
    %29 = vector.extract_strided_slice %28 {offsets = [0, 0], sizes = [24, 16], strides = [1, 1]} : vector<96x16xbf16> to vector<24x16xbf16>
    %c0_25 = arith.constant 0 : index
    %c0_26 = arith.constant 0 : index
    %c8 = arith.constant 8 : index
    %c0_27 = arith.constant 0 : index
    %30 = vector.load %arg11[%c0_25, %c0_26, %c8, %c0_27] : memref<1x4x32x16xbf16, #tpu.memory_space<vmem>>, vector<1x1x24x16xbf16>
    %31 = vector.shape_cast %30 : vector<1x1x24x16xbf16> to vector<24x16xbf16>
    %32 = vector.shape_cast %29 : vector<24x16xbf16> to vector<1x1x24x16xbf16>
    tpu.vector_store %arg11[%c0_25, %c0_26, %c8, %c0_27], %32 {strides = array<i32>} : memref<1x4x32x16xbf16, #tpu.memory_space<vmem>>, vector<1x1x24x16xbf16>,
    %33 = vector.extract_strided_slice %28 {offsets = [24, 0], sizes = [24, 16], strides = [1, 1]} : vector<96x16xbf16> to vector<24x16xbf16>
    %c0_28 = arith.constant 0 : index
    %c1_29 = arith.constant 1 : index
    %c8_30 = arith.constant 8 : index
    %c0_31 = arith.constant 0 : index
    %34 = vector.load %arg11[%c0_28, %c1_29, %c8_30, %c0_31] : memref<1x4x32x16xbf16, #tpu.memory_space<vmem>>, vector<1x1x24x16xbf16>
    %35 = vector.shape_cast %34 : vector<1x1x24x16xbf16> to vector<24x16xbf16>
    %36 = vector.shape_cast %33 : vector<24x16xbf16> to vector<1x1x24x16xbf16>
    tpu.vector_store %arg11[%c0_28, %c1_29, %c8_30, %c0_31], %36 {strides = array<i32>} : memref<1x4x32x16xbf16, #tpu.memory_space<vmem>>, vector<1x1x24x16xbf16>,
    %37 = vector.extract_strided_slice %28 {offsets = [48, 0], sizes = [24, 16], strides = [1, 1]} : vector<96x16xbf16> to vector<24x16xbf16>
    %c0_32 = arith.constant 0 : index
    %c2_33 = arith.constant 2 : index
    %c8_34 = arith.constant 8 : index
    %c0_35 = arith.constant 0 : index
    %38 = vector.load %arg11[%c0_32, %c2_33, %c8_34, %c0_35] : memref<1x4x32x16xbf16, #tpu.memory_space<vmem>>, vector<1x1x24x16xbf16>
    %39 = vector.shape_cast %38 : vector<1x1x24x16xbf16> to vector<24x16xbf16>
    %40 = vector.shape_cast %37 : vector<24x16xbf16> to vector<1x1x24x16xbf16>
    tpu.vector_store %arg11[%c0_32, %c2_33, %c8_34, %c0_35], %40 {strides = array<i32>} : memref<1x4x32x16xbf16, #tpu.memory_space<vmem>>, vector<1x1x24x16xbf16>,
    %41 = vector.extract_strided_slice %28 {offsets = [72, 0], sizes = [24, 16], strides = [1, 1]} : vector<96x16xbf16> to vector<24x16xbf16>
    %c0_36 = arith.constant 0 : index
    %c3_37 = arith.constant 3 : index
    %c8_38 = arith.constant 8 : index
    %c0_39 = arith.constant 0 : index
    %42 = vector.load %arg11[%c0_36, %c3_37, %c8_38, %c0_39] : memref<1x4x32x16xbf16, #tpu.memory_space<vmem>>, vector<1x1x24x16xbf16>
    %43 = vector.shape_cast %42 : vector<1x1x24x16xbf16> to vector<24x16xbf16>
    %44 = vector.shape_cast %41 : vector<24x16xbf16> to vector<1x1x24x16xbf16>
    tpu.vector_store %arg11[%c0_36, %c3_37, %c8_38, %c0_39], %44 {strides = array<i32>} : memref<1x4x32x16xbf16, #tpu.memory_space<vmem>>, vector<1x1x24x16xbf16>,
    %45 = vector.extract_strided_slice %18 {offsets = [0, 16], sizes = [24, 32], strides = [1, 1]} : vector<96x48xf32> to vector<24x32xf32>
    %c0_40 = arith.constant 0 : index
    %c0_41 = arith.constant 0 : index
    %46 = vector.load %arg8[%c0_40, %c0_41] : memref<1x32xf32, #tpu.memory_space<vmem>>, vector<1x32xf32>
    %47 = vector.broadcast %46 : vector<1x32xf32> to vector<24x32xf32>
    %48 = arith.addf %45, %47 : vector<24x32xf32>
    %cst_42 = arith.constant 0.000000e+00 : f32
    %49 = vector.broadcast %cst_42 : f32 to vector<24x16xf32>
    %c0_43 = arith.constant 0 : index
    %c3_44 = arith.constant 3 : index
    %c1_45 = arith.constant 1 : index
    %c0_46 = arith.constant 0 : index
    %50 = vector.load %arg11[%c0_43, %c3_44, %c1_45, %c0_46] : memref<1x4x32x16xbf16, #tpu.memory_space<vmem>>, vector<1x1x24x16xbf16>
    %51 = vector.shape_cast %50 : vector<1x1x24x16xbf16> to vector<24x16xbf16>
    %c0_47 = arith.constant 0 : index
    %c0_48 = arith.constant 0 : index
    %c0_49 = arith.constant 0 : index
    %52 = vector.load %arg4[%c0_47, %c0_48, %c0_49] : memref<9x16x16xbf16, #tpu.memory_space<vmem>>, vector<1x16x16xbf16>
    %53 = vector.shape_cast %52 : vector<1x16x16xbf16> to vector<16x16xbf16>
    %cst_50 = arith.constant dense<0.000000e+00> : vector<24x16xf32>
    %54 = tpu.matmul %51, %53, %cst_50 {dimension_numbers = #tpu.dot_dimension_numbers<[1], [0], [0], [1], [0, 0, 1, 1], [], []>} : vector<24x16xbf16>, vector<16x16xbf16>, vector<24x16xf32> -> vector<24x16xf32>
    %55 = arith.addf %49, %54 : vector<24x16xf32>
    %c0_51 = arith.constant 0 : index
    %c2_52 = arith.constant 2 : index
    %c2_53 = arith.constant 2 : index
    %c0_54 = arith.constant 0 : index
    %56 = vector.load %arg11[%c0_51, %c2_52, %c2_53, %c0_54] : memref<1x4x32x16xbf16, #tpu.memory_space<vmem>>, vector<1x1x24x16xbf16>
    %57 = vector.shape_cast %56 : vector<1x1x24x16xbf16> to vector<24x16xbf16>
    %c1_55 = arith.constant 1 : index
    %c0_56 = arith.constant 0 : index
    %c0_57 = arith.constant 0 : index
    %58 = vector.load %arg4[%c1_55, %c0_56, %c0_57] : memref<9x16x16xbf16, #tpu.memory_space<vmem>>, vector<1x16x16xbf16>
    %59 = vector.shape_cast %58 : vector<1x16x16xbf16> to vector<16x16xbf16>
    %cst_58 = arith.constant dense<0.000000e+00> : vector<24x16xf32>
    %60 = tpu.matmul %57, %59, %cst_58 {dimension_numbers = #tpu.dot_dimension_numbers<[1], [0], [0], [1], [0, 0, 1, 1], [], []>} : vector<24x16xbf16>, vector<16x16xbf16>, vector<24x16xf32> -> vector<24x16xf32>
    %61 = arith.addf %55, %60 : vector<24x16xf32>
    %c0_59 = arith.constant 0 : index
    %c3_60 = arith.constant 3 : index
    %c2_61 = arith.constant 2 : index
    %c0_62 = arith.constant 0 : index
    %62 = vector.load %arg11[%c0_59, %c3_60, %c2_61, %c0_62] : memref<1x4x32x16xbf16, #tpu.memory_space<vmem>>, vector<1x1x24x16xbf16>
    %63 = vector.shape_cast %62 : vector<1x1x24x16xbf16> to vector<24x16xbf16>
    %c2_63 = arith.constant 2 : index
    %c0_64 = arith.constant 0 : index
    %c0_65 = arith.constant 0 : index
    %64 = vector.load %arg4[%c2_63, %c0_64, %c0_65] : memref<9x16x16xbf16, #tpu.memory_space<vmem>>, vector<1x16x16xbf16>
    %65 = vector.shape_cast %64 : vector<1x16x16xbf16> to vector<16x16xbf16>
    %cst_66 = arith.constant dense<0.000000e+00> : vector<24x16xf32>
    %66 = tpu.matmul %63, %65, %cst_66 {dimension_numbers = #tpu.dot_dimension_numbers<[1], [0], [0], [1], [0, 0, 1, 1], [], []>} : vector<24x16xbf16>, vector<16x16xbf16>, vector<24x16xf32> -> vector<24x16xf32>
    %67 = arith.addf %61, %66 : vector<24x16xf32>
    %c0_67 = arith.constant 0 : index
    %c1_68 = arith.constant 1 : index
    %c7 = arith.constant 7 : index
    %c0_69 = arith.constant 0 : index
    %68 = vector.load %arg11[%c0_67, %c1_68, %c7, %c0_69] : memref<1x4x32x16xbf16, #tpu.memory_space<vmem>>, vector<1x1x24x16xbf16>
    %69 = vector.shape_cast %68 : vector<1x1x24x16xbf16> to vector<24x16xbf16>
    %c3_70 = arith.constant 3 : index
    %c0_71 = arith.constant 0 : index
    %c0_72 = arith.constant 0 : index
    %70 = vector.load %arg4[%c3_70, %c0_71, %c0_72] : memref<9x16x16xbf16, #tpu.memory_space<vmem>>, vector<1x16x16xbf16>
    %71 = vector.shape_cast %70 : vector<1x16x16xbf16> to vector<16x16xbf16>
    %cst_73 = arith.constant dense<0.000000e+00> : vector<24x16xf32>
    %72 = tpu.matmul %69, %71, %cst_73 {dimension_numbers = #tpu.dot_dimension_numbers<[1], [0], [0], [1], [0, 0, 1, 1], [], []>} : vector<24x16xbf16>, vector<16x16xbf16>, vector<24x16xf32> -> vector<24x16xf32>
    %73 = arith.addf %67, %72 : vector<24x16xf32>
    %c0_74 = arith.constant 0 : index
    %c0_75 = arith.constant 0 : index
    %c8_76 = arith.constant 8 : index
    %c0_77 = arith.constant 0 : index
    %74 = vector.load %arg11[%c0_74, %c0_75, %c8_76, %c0_77] : memref<1x4x32x16xbf16, #tpu.memory_space<vmem>>, vector<1x1x24x16xbf16>
    %75 = vector.shape_cast %74 : vector<1x1x24x16xbf16> to vector<24x16xbf16>
    %c4 = arith.constant 4 : index
    %c0_78 = arith.constant 0 : index
    %c0_79 = arith.constant 0 : index
    %76 = vector.load %arg4[%c4, %c0_78, %c0_79] : memref<9x16x16xbf16, #tpu.memory_space<vmem>>, vector<1x16x16xbf16>
    %77 = vector.shape_cast %76 : vector<1x16x16xbf16> to vector<16x16xbf16>
    %cst_80 = arith.constant dense<0.000000e+00> : vector<24x16xf32>
    %78 = tpu.matmul %75, %77, %cst_80 {dimension_numbers = #tpu.dot_dimension_numbers<[1], [0], [0], [1], [0, 0, 1, 1], [], []>} : vector<24x16xbf16>, vector<16x16xbf16>, vector<24x16xf32> -> vector<24x16xf32>
    %79 = arith.addf %73, %78 : vector<24x16xf32>
    %c0_81 = arith.constant 0 : index
    %c1_82 = arith.constant 1 : index
    %c8_83 = arith.constant 8 : index
    %c0_84 = arith.constant 0 : index
    %80 = vector.load %arg11[%c0_81, %c1_82, %c8_83, %c0_84] : memref<1x4x32x16xbf16, #tpu.memory_space<vmem>>, vector<1x1x24x16xbf16>
    %81 = vector.shape_cast %80 : vector<1x1x24x16xbf16> to vector<24x16xbf16>
    %c5 = arith.constant 5 : index
    %c0_85 = arith.constant 0 : index
    %c0_86 = arith.constant 0 : index
    %82 = vector.load %arg4[%c5, %c0_85, %c0_86] : memref<9x16x16xbf16, #tpu.memory_space<vmem>>, vector<1x16x16xbf16>
    %83 = vector.shape_cast %82 : vector<1x16x16xbf16> to vector<16x16xbf16>
    %cst_87 = arith.constant dense<0.000000e+00> : vector<24x16xf32>
    %84 = tpu.matmul %81, %83, %cst_87 {dimension_numbers = #tpu.dot_dimension_numbers<[1], [0], [0], [1], [0, 0, 1, 1], [], []>} : vector<24x16xbf16>, vector<16x16xbf16>, vector<24x16xf32> -> vector<24x16xf32>
    %85 = arith.addf %79, %84 : vector<24x16xf32>
    %c0_88 = arith.constant 0 : index
    %c3_89 = arith.constant 3 : index
    %c7_90 = arith.constant 7 : index
    %c0_91 = arith.constant 0 : index
    %86 = vector.load %arg11[%c0_88, %c3_89, %c7_90, %c0_91] : memref<1x4x32x16xbf16, #tpu.memory_space<vmem>>, vector<1x1x24x16xbf16>
    %87 = vector.shape_cast %86 : vector<1x1x24x16xbf16> to vector<24x16xbf16>
    %c6 = arith.constant 6 : index
    %c0_92 = arith.constant 0 : index
    %c0_93 = arith.constant 0 : index
    %88 = vector.load %arg4[%c6, %c0_92, %c0_93] : memref<9x16x16xbf16, #tpu.memory_space<vmem>>, vector<1x16x16xbf16>
    %89 = vector.shape_cast %88 : vector<1x16x16xbf16> to vector<16x16xbf16>
    %cst_94 = arith.constant dense<0.000000e+00> : vector<24x16xf32>
    %90 = tpu.matmul %87, %89, %cst_94 {dimension_numbers = #tpu.dot_dimension_numbers<[1], [0], [0], [1], [0, 0, 1, 1], [], []>} : vector<24x16xbf16>, vector<16x16xbf16>, vector<24x16xf32> -> vector<24x16xf32>
    %91 = arith.addf %85, %90 : vector<24x16xf32>
    %c0_95 = arith.constant 0 : index
    %c2_96 = arith.constant 2 : index
    %c8_97 = arith.constant 8 : index
    %c0_98 = arith.constant 0 : index
    %92 = vector.load %arg11[%c0_95, %c2_96, %c8_97, %c0_98] : memref<1x4x32x16xbf16, #tpu.memory_space<vmem>>, vector<1x1x24x16xbf16>
    %93 = vector.shape_cast %92 : vector<1x1x24x16xbf16> to vector<24x16xbf16>
    %c7_99 = arith.constant 7 : index
    %c0_100 = arith.constant 0 : index
    %c0_101 = arith.constant 0 : index
    %94 = vector.load %arg4[%c7_99, %c0_100, %c0_101] : memref<9x16x16xbf16, #tpu.memory_space<vmem>>, vector<1x16x16xbf16>
    %95 = vector.shape_cast %94 : vector<1x16x16xbf16> to vector<16x16xbf16>
    %cst_102 = arith.constant dense<0.000000e+00> : vector<24x16xf32>
    %96 = tpu.matmul %93, %95, %cst_102 {dimension_numbers = #tpu.dot_dimension_numbers<[1], [0], [0], [1], [0, 0, 1, 1], [], []>} : vector<24x16xbf16>, vector<16x16xbf16>, vector<24x16xf32> -> vector<24x16xf32>
    %97 = arith.addf %91, %96 : vector<24x16xf32>
    %c0_103 = arith.constant 0 : index
    %c3_104 = arith.constant 3 : index
    %c8_105 = arith.constant 8 : index
    %c0_106 = arith.constant 0 : index
    %98 = vector.load %arg11[%c0_103, %c3_104, %c8_105, %c0_106] : memref<1x4x32x16xbf16, #tpu.memory_space<vmem>>, vector<1x1x24x16xbf16>
    %99 = vector.shape_cast %98 : vector<1x1x24x16xbf16> to vector<24x16xbf16>
    %c8_107 = arith.constant 8 : index
    %c0_108 = arith.constant 0 : index
    %c0_109 = arith.constant 0 : index
    %100 = vector.load %arg4[%c8_107, %c0_108, %c0_109] : memref<9x16x16xbf16, #tpu.memory_space<vmem>>, vector<1x16x16xbf16>
    %101 = vector.shape_cast %100 : vector<1x16x16xbf16> to vector<16x16xbf16>
    %cst_110 = arith.constant dense<0.000000e+00> : vector<24x16xf32>
    %102 = tpu.matmul %99, %101, %cst_110 {dimension_numbers = #tpu.dot_dimension_numbers<[1], [0], [0], [1], [0, 0, 1, 1], [], []>} : vector<24x16xbf16>, vector<16x16xbf16>, vector<24x16xf32> -> vector<24x16xf32>
    %103 = arith.addf %97, %102 : vector<24x16xf32>
    %c0_111 = arith.constant 0 : index
    %c0_112 = arith.constant 0 : index
    %104 = vector.load %arg7[%c0_111, %c0_112] : memref<1x16xf32, #tpu.memory_space<vmem>>, vector<1x16xf32>
    %105 = vector.broadcast %104 : vector<1x16xf32> to vector<24x16xf32>
    %106 = arith.addf %103, %105 : vector<24x16xf32>
    %cst_113 = arith.constant 0.000000e+00 : f32
    %107 = vector.broadcast %cst_113 : f32 to vector<24x16xf32>
    %108 = arith.maximumf %106, %107 : vector<24x16xf32>
    %109 = arith.truncf %108 : vector<24x16xf32> to vector<24x16xbf16>
    %c0_114 = arith.constant 0 : index
    %c0_115 = arith.constant 0 : index
    %110 = vector.load %arg5[%c0_114, %c0_115] : memref<16x32xbf16, #tpu.memory_space<vmem>>, vector<16x32xbf16>
    %cst_116 = arith.constant dense<0.000000e+00> : vector<24x32xf32>
    %111 = tpu.matmul %109, %110, %cst_116 {dimension_numbers = #tpu.dot_dimension_numbers<[1], [0], [0], [1], [0, 0, 1, 1], [], []>} : vector<24x16xbf16>, vector<16x32xbf16>, vector<24x32xf32> -> vector<24x32xf32>
    %c0_117 = arith.constant 0 : index
    %c0_118 = arith.constant 0 : index
    %112 = vector.load %arg9[%c0_117, %c0_118] : memref<1x32xf32, #tpu.memory_space<vmem>>, vector<1x32xf32>
    %113 = vector.broadcast %112 : vector<1x32xf32> to vector<24x32xf32>
    %114 = arith.addf %111, %113 : vector<24x32xf32>
    %115 = arith.addf %114, %48 : vector<24x32xf32>
    %cst_119 = arith.constant 0.000000e+00 : f32
    %116 = vector.broadcast %cst_119 : f32 to vector<24x32xf32>
    %117 = arith.maximumf %115, %116 : vector<24x32xf32>
    %c0_120 = arith.constant 0 : index
    %c0_121 = arith.constant 0 : index
    %c0_122 = arith.constant 0 : index
    %118 = vector.load %arg10[%c0_120, %c0_121, %c0_122] : memref<1x24x32xf32, #tpu.memory_space<vmem>>, vector<1x24x32xf32>
    %119 = vector.shape_cast %118 : vector<1x24x32xf32> to vector<24x32xf32>
    %120 = vector.shape_cast %117 : vector<24x32xf32> to vector<1x24x32xf32>
    tpu.vector_store %arg10[%c0_120, %c0_121, %c0_122], %120 {strides = array<i32>} : memref<1x24x32xf32, #tpu.memory_space<vmem>>, vector<1x24x32xf32>,
    return
  }
  func.func @transform_0(%arg0: i32) -> (i32, i32) {
    %c0_i32 = arith.constant 0 : i32
    %c0_i32_0 = arith.constant 0 : i32
    return %arg0, %c0_i32 : i32, i32
  }
  func.func @transform_1(%arg0: i32) -> (i32, i32) {
    %c0_i32 = arith.constant 0 : i32
    %c0_i32_0 = arith.constant 0 : i32
    %c0_i32_1 = arith.constant 0 : i32
    return %c0_i32, %c0_i32_0 : i32, i32
  }
  func.func @transform_2(%arg0: i32) -> (i32, i32) {
    %c0_i32 = arith.constant 0 : i32
    %c0_i32_0 = arith.constant 0 : i32
    %c0_i32_1 = arith.constant 0 : i32
    return %c0_i32, %c0_i32_0 : i32, i32
  }
  func.func @transform_3(%arg0: i32) -> (i32, i32, i32) {
    %c0_i32 = arith.constant 0 : i32
    %c0_i32_0 = arith.constant 0 : i32
    %c0_i32_1 = arith.constant 0 : i32
    %c0_i32_2 = arith.constant 0 : i32
    return %c0_i32, %c0_i32_0, %c0_i32_1 : i32, i32, i32
  }
  func.func @transform_4(%arg0: i32) -> (i32, i32) {
    %c0_i32 = arith.constant 0 : i32
    %c0_i32_0 = arith.constant 0 : i32
    %c0_i32_1 = arith.constant 0 : i32
    return %c0_i32, %c0_i32_0 : i32, i32
  }
  func.func @transform_5(%arg0: i32) -> (i32, i32) {
    %c0_i32 = arith.constant 0 : i32
    %c0_i32_0 = arith.constant 0 : i32
    %c0_i32_1 = arith.constant 0 : i32
    return %c0_i32, %c0_i32_0 : i32, i32
  }
  func.func @transform_6(%arg0: i32) -> (i32, i32) {
    %c0_i32 = arith.constant 0 : i32
    %c0_i32_0 = arith.constant 0 : i32
    %c0_i32_1 = arith.constant 0 : i32
    return %c0_i32, %c0_i32_0 : i32, i32
  }
  func.func @transform_7(%arg0: i32) -> (i32, i32) {
    %c0_i32 = arith.constant 0 : i32
    %c0_i32_0 = arith.constant 0 : i32
    %c0_i32_1 = arith.constant 0 : i32
    return %c0_i32, %c0_i32_0 : i32, i32
  }
  func.func @transform_8(%arg0: i32) -> (i32, i32) {
    %c0_i32 = arith.constant 0 : i32
    %c0_i32_0 = arith.constant 0 : i32
    %c0_i32_1 = arith.constant 0 : i32
    return %c0_i32, %c0_i32_0 : i32, i32
  }
  func.func @transform_9(%arg0: i32) -> (i32, i32, i32) {
    %c0_i32 = arith.constant 0 : i32
    %c0_i32_0 = arith.constant 0 : i32
    %c0_i32_1 = arith.constant 0 : i32
    return %arg0, %c0_i32, %c0_i32_0 : i32, i32, i32
  }
}

</mosaic_0001>

<llo_original>
// kernel: tpu_custom_call.1
$region0: #{tpu_custom_call.1}
  #allocation0 [shape = 'u32[]', space=smem, size = 0x4, offset = 0x4, fixed_abs, tag = 'smem constant byte address 0x4 - core index']
  #allocation1 [shape = 'u32[72,128]{1,0:T(1,128)}', space=vmem, size = 0x9000, scoped, tag = 'internal scratch']
  #allocation2 [shape = 'bf16[1,4,32,16]{3,2,1,0:T(8,128)(2,1)}', space=vmem, size = 0x8000, scoped, tag = 'scratch operand']
  %s0 = inlined_call_operand.vmem [shape: bf16[192,8], index: 0, kind: input, shape index: {}]
  %s1 = inlined_call_operand.vmem [shape: f32[96,1], index: 1, kind: input, shape index: {}]
  %s2 = inlined_call_operand.vmem [shape: bf16[8,48], index: 2, kind: input, shape index: {}]
  %s3 = inlined_call_operand.vmem [shape: bf16[9,16,16], index: 3, kind: input, shape index: {}]
  %s4 = inlined_call_operand.vmem [shape: bf16[16,32], index: 4, kind: input, shape index: {}]
  %s5 = inlined_call_operand.vmem [shape: f32[1,16], index: 5, kind: input, shape index: {}]
  %s6 = inlined_call_operand.vmem [shape: f32[1,16], index: 6, kind: input, shape index: {}]
  %s7 = inlined_call_operand.vmem [shape: f32[1,32], index: 7, kind: input, shape index: {}]
  %s8 = inlined_call_operand.vmem [shape: f32[1,32], index: 8, kind: input, shape index: {}]
  %s9 = inlined_call_operand.hbm [shape: f32[2,24,32], index: 9, kind: output, shape index: {}]
  %s10 = sld [smem:[#allocation0]]
  $region69: #{tpu_custom_call.1} parent=0
    _
  %s12 = ssub.s32 1, %s10
  %s13 = scalar_select 0, %s12, %s10
  $region1: #{tpu_custom_call.1} parent=0
    #allocation3 [shape = 'u8[24576]{0}', space=vmem, size = 0x6000, scoped, tag = 'output window, operand 0']
    #allocation4 [shape = 's32[2]{0}', space=sflag, size = 0x8, scoped, tag = 'scoped memory for tpu_custom_call.1']
    %14 = vsyncpa [#allocation4], 0
    %s15 = scalar_lea.sflag [#allocation4], 1
    %16 = vsyncpa %s15, 0
    loop: start=0, step=1, limit=4
    $region2: #{tpu_custom_call.1} parent=1 // loop_pre_header
      _
    $region3: #{tpu_custom_call.1} parent=1 // loop_header
      %s18 = sphi 0, %s22
      %p19 = scmp.ge.s32.totalorder %s18, 4
      %s28 = sphi 0, %s30
      %s31 = sphi 0, %s28
      %s32 = sphi 0, %s31
      %s48 = sphi 0, %s32
      %s52 = sphi 0, %s52
      %s54 = sphi 0, %s52
      %s55 = sphi 0, %s54
      %s69 = sphi 0, %s55
      %s73 = sphi 0, %s73
      %s75 = sphi 0, %s73
      %s76 = sphi 0, %s75
      %s90 = sphi 0, %s76
      %s94 = sphi 0, %s94
      %s96 = sphi 0, %s94
      %s97 = sphi 0, %s96
      %s111 = sphi 0, %s97
      %s115 = sphi 0, %s115
      %s117 = sphi 0, %s115
      %s118 = sphi 0, %s117
      %s132 = sphi 0, %s118
      %s136 = sphi 0, %s136
      %s138 = sphi 0, %s136
      %s139 = sphi 0, %s138
      %s153 = sphi 0, %s139
      %s157 = sphi 0, %s157
      %s159 = sphi 0, %s157
      %s160 = sphi 0, %s159
      %s174 = sphi 0, %s160
      %s178 = sphi 0, %s178
      %s180 = sphi 0, %s178
      %s181 = sphi 0, %s180
      %s195 = sphi 0, %s181
      %s199 = sphi 0, %s199
      %s201 = sphi 0, %s199
      %s202 = sphi 0, %s201
      %s216 = sphi 0, %s202
      %s222 = sphi 0, %s224
      %s225 = sphi 0, %s222
      %s226 = sphi 0, %s225
      %s242 = sphi 0, %s226
    $region4: #{tpu_custom_call.1} parent=1 // loop_header_branch
      %21 = sbr.rel (%p19) target = $region8
    $region5: #{tpu_custom_call.1} parent=1 // loop_body
      %s23 = ssub.s32 %s18, 1
      %s24 = ssub.s32 %s18, 2
      %s25 = sadd.s32 %s18, 1
      %s26 = ssub.s32 %s18, %s25
      %p27 = scmp.eq.s32.totalorder %s26, 0
      %s29 = sadd.s32 %s28, 1
      %s30 = scalar_select %p27, %s28, %s29
      %p33 = pneg %p27
      %p34 = scmp.eq.s32.totalorder %s18, 1
      %p35 = por %p33, %p34
      %p36 = scmp.ne.s32.totalorder %s28, %s31
      %p37 = scmp.eq.s32.totalorder %s18, 0
      %p38 = por %p36, %p37
      %p39 = scmp.ne.s32.totalorder %s28, %s31
      %p40 = scmp.eq.s32.totalorder %s23, 1
      %p41 = por %p39, %p40
      %p42 = scmp.ne.s32.totalorder %s31, %s32
      %p43 = scmp.eq.s32.totalorder %s23, 0
      %p44 = por %p42, %p43
      %p45 = scmp.ne.s32.totalorder %s31, %s32
      %p46 = scmp.eq.s32.totalorder %s24, 1
      %p47 = por %p45, %p46
      %p49 = scmp.ne.s32.totalorder %s32, %s48
      %p50 = scmp.eq.s32.totalorder %s24, 0
      %p51 = por %p49, %p50
      %s53 = sadd.s32 %s52, 1
      %p56 = scmp.eq.s32.totalorder %s18, 1
      %p57 = scmp.ne.s32.totalorder %s52, %s54
      %p58 = scmp.eq.s32.totalorder %s18, 0
      %p59 = por %p57, %p58
      %p60 = scmp.ne.s32.totalorder %s52, %s54
      %p61 = scmp.eq.s32.totalorder %s23, 1
      %p62 = por %p60, %p61
      %p63 = scmp.ne.s32.totalorder %s54, %s55
      %p64 = scmp.eq.s32.totalorder %s23, 0
      %p65 = por %p63, %p64
      %p66 = scmp.ne.s32.totalorder %s54, %s55
      %p67 = scmp.eq.s32.totalorder %s24, 1
      %p68 = por %p66, %p67
      %p70 = scmp.ne.s32.totalorder %s55, %s69
      %p71 = scmp.eq.s32.totalorder %s24, 0
      %p72 = por %p70, %p71
      %s74 = sadd.s32 %s73, 1
      %p77 = scmp.eq.s32.totalorder %s18, 1
      %p78 = scmp.ne.s32.totalorder %s73, %s75
      %p79 = scmp.eq.s32.totalorder %s18, 0
      %p80 = por %p78, %p79
      %p81 = scmp.ne.s32.totalorder %s73, %s75
      %p82 = scmp.eq.s32.totalorder %s23, 1
      %p83 = por %p81, %p82
      %p84 = scmp.ne.s32.totalorder %s75, %s76
      %p85 = scmp.eq.s32.totalorder %s23, 0
      %p86 = por %p84, %p85
      %p87 = scmp.ne.s32.totalorder %s75, %s76
      %p88 = scmp.eq.s32.totalorder %s24, 1
      %p89 = por %p87, %p88
      %p91 = scmp.ne.s32.totalorder %s76, %s90
      %p92 = scmp.eq.s32.totalorder %s24, 0
      %p93 = por %p91, %p92
      %s95 = sadd.s32 %s94, 1
      %p98 = scmp.eq.s32.totalorder %s18, 1
      %p99 = scmp.ne.s32.totalorder %s94, %s96
      %p100 = scmp.eq.s32.totalorder %s18, 0
      %p101 = por %p99, %p100
      %p102 = scmp.ne.s32.totalorder %s94, %s96
      %p103 = scmp.eq.s32.totalorder %s23, 1
      %p104 = por %p102, %p103
      %p105 = scmp.ne.s32.totalorder %s96, %s97
      %p106 = scmp.eq.s32.totalorder %s23, 0
      %p107 = por %p105, %p106
      %p108 = scmp.ne.s32.totalorder %s96, %s97
      %p109 = scmp.eq.s32.totalorder %s24, 1
      %p110 = por %p108, %p109
      %p112 = scmp.ne.s32.totalorder %s97, %s111
      %p113 = scmp.eq.s32.totalorder %s24, 0
      %p114 = por %p112, %p113
      %s116 = sadd.s32 %s115, 1
      %p119 = scmp.eq.s32.totalorder %s18, 1
      %p120 = scmp.ne.s32.totalorder %s115, %s117
      %p121 = scmp.eq.s32.totalorder %s18, 0
      %p122 = por %p120, %p121
      %p123 = scmp.ne.s32.totalorder %s115, %s117
      %p124 = scmp.eq.s32.totalorder %s23, 1
      %p125 = por %p123, %p124
      %p126 = scmp.ne.s32.totalorder %s117, %s118
      %p127 = scmp.eq.s32.totalorder %s23, 0
      %p128 = por %p126, %p127
      %p129 = scmp.ne.s32.totalorder %s117, %s118
      %p130 = scmp.eq.s32.totalorder %s24, 1
      %p131 = por %p129, %p130
      %p133 = scmp.ne.s32.totalorder %s118, %s132
      %p134 = scmp.eq.s32.totalorder %s24, 0
      %p135 = por %p133, %p134
      %s137 = sadd.s32 %s136, 1
      %p140 = scmp.eq.s32.totalorder %s18, 1
      %p141 = scmp.ne.s32.totalorder %s136, %s138
      %p142 = scmp.eq.s32.totalorder %s18, 0
      %p143 = por %p141, %p142
      %p144 = scmp.ne.s32.totalorder %s136, %s138
      %p145 = scmp.eq.s32.totalorder %s23, 1
      %p146 = por %p144, %p145
      %p147 = scmp.ne.s32.totalorder %s138, %s139
      %p148 = scmp.eq.s32.totalorder %s23, 0
      %p149 = por %p147, %p148
      %p150 = scmp.ne.s32.totalorder %s138, %s139
      %p151 = scmp.eq.s32.totalorder %s24, 1
      %p152 = por %p150, %p151
      %p154 = scmp.ne.s32.totalorder %s139, %s153
      %p155 = scmp.eq.s32.totalorder %s24, 0
      %p156 = por %p154, %p155
      %s158 = sadd.s32 %s157, 1
      %p161 = scmp.eq.s32.totalorder %s18, 1
      %p162 = scmp.ne.s32.totalorder %s157, %s159
      %p163 = scmp.eq.s32.totalorder %s18, 0
      %p164 = por %p162, %p163
      %p165 = scmp.ne.s32.totalorder %s157, %s159
      %p166 = scmp.eq.s32.totalorder %s23, 1
      %p167 = por %p165, %p166
      %p168 = scmp.ne.s32.totalorder %s159, %s160
      %p169 = scmp.eq.s32.totalorder %s23, 0
      %p170 = por %p168, %p169
      %p171 = scmp.ne.s32.totalorder %s159, %s160
      %p172 = scmp.eq.s32.totalorder %s24, 1
      %p173 = por %p171, %p172
      %p175 = scmp.ne.s32.totalorder %s160, %s174
      %p176 = scmp.eq.s32.totalorder %s24, 0
      %p177 = por %p175, %p176
      %s179 = sadd.s32 %s178, 1
      %p182 = scmp.eq.s32.totalorder %s18, 1
      %p183 = scmp.ne.s32.totalorder %s178, %s180
      %p184 = scmp.eq.s32.totalorder %s18, 0
      %p185 = por %p183, %p184
      %p186 = scmp.ne.s32.totalorder %s178, %s180
      %p187 = scmp.eq.s32.totalorder %s23, 1
      %p188 = por %p186, %p187
      %p189 = scmp.ne.s32.totalorder %s180, %s181
      %p190 = scmp.eq.s32.totalorder %s23, 0
      %p191 = por %p189, %p190
      %p192 = scmp.ne.s32.totalorder %s180, %s181
      %p193 = scmp.eq.s32.totalorder %s24, 1
      %p194 = por %p192, %p193
      %p196 = scmp.ne.s32.totalorder %s181, %s195
      %p197 = scmp.eq.s32.totalorder %s24, 0
      %p198 = por %p196, %p197
      %s200 = sadd.s32 %s199, 1
      %p203 = scmp.eq.s32.totalorder %s18, 1
      %p204 = scmp.ne.s32.totalorder %s199, %s201
      %p205 = scmp.eq.s32.totalorder %s18, 0
      %p206 = por %p204, %p205
      %p207 = scmp.ne.s32.totalorder %s199, %s201
      %p208 = scmp.eq.s32.totalorder %s23, 1
      %p209 = por %p207, %p208
      %p210 = scmp.ne.s32.totalorder %s201, %s202
      %p211 = scmp.eq.s32.totalorder %s23, 0
      %p212 = por %p210, %p211
      %p213 = scmp.ne.s32.totalorder %s201, %s202
      %p214 = scmp.eq.s32.totalorder %s24, 1
      %p215 = por %p213, %p214
      %p217 = scmp.ne.s32.totalorder %s202, %s216
      %p218 = scmp.eq.s32.totalorder %s24, 0
      %p219 = por %p217, %p218
      %s220 = ssub.s32 %s18, %s25
      %p221 = scmp.eq.s32.totalorder %s220, 0
      %s223 = sadd.s32 %s222, 1
      %s224 = scalar_select %p221, %s222, %s223
      %p227 = pneg %p221
      %p228 = scmp.eq.s32.totalorder %s18, 1
      %p229 = por %p227, %p228
      %p230 = scmp.ne.s32.totalorder %s222, %s225
      %p231 = scmp.eq.s32.totalorder %s18, 0
      %p232 = por %p230, %p231
      %p233 = scmp.ne.s32.totalorder %s222, %s225
      %p234 = scmp.eq.s32.totalorder %s23, 1
      %p235 = por %p233, %p234
      %p236 = scmp.ne.s32.totalorder %s225, %s226
      %p237 = scmp.eq.s32.totalorder %s23, 0
      %p238 = por %p236, %p237
      %p239 = scmp.ne.s32.totalorder %s225, %s226
      %p240 = scmp.eq.s32.totalorder %s24, 1
      %p241 = por %p239, %p240
      %p243 = scmp.ne.s32.totalorder %s226, %s242
      %p244 = scmp.eq.s32.totalorder %s24, 0
      %p245 = por %p243, %p244
      %p246 = scmp.le.s32.totalorder 1, %s18
      %p247 = scmp.lt.s32.totalorder %s18, 3
      %p248 = pnand %p246, %p247
      %p249 = pneg %p248
      // Predicated region
      $region9: #{tpu_custom_call.1} parent=5 // pred_check
        _
      $region10: #{tpu_custom_call.1} parent=5 // pred_check_branch
        %251 = sbr.rel (%p248) target = $region12
      $region11: #{tpu_custom_call.1} parent=5 // pred_region
        %s252 = ssub.s32 %s18, 1
        // Predicated region
        $region13: #{tpu_custom_call.1} parent=11 // pred_check
          %p253 = pneg %p65
        $region14: #{tpu_custom_call.1} parent=11 // pred_check_branch
          %255 = sbr.rel (%p253) target = $region16
        $region15: #{tpu_custom_call.1} parent=11 // pred_region
          _
        $region16: #{tpu_custom_call.1} parent=11 // pred_fallthru
          _
        // Predicated region
        $region17: #{tpu_custom_call.1} parent=11 // pred_check
          %p256 = pneg %p86
        $region18: #{tpu_custom_call.1} parent=11 // pred_check_branch
          %258 = sbr.rel (%p256) target = $region20
        $region19: #{tpu_custom_call.1} parent=11 // pred_region
          _
        $region20: #{tpu_custom_call.1} parent=11 // pred_fallthru
          _
        // Predicated region
        $region21: #{tpu_custom_call.1} parent=11 // pred_check
          %p259 = pneg %p107
        $region22: #{tpu_custom_call.1} parent=11 // pred_check_branch
          %261 = sbr.rel (%p259) target = $region24
        $region23: #{tpu_custom_call.1} parent=11 // pred_region
          _
        $region24: #{tpu_custom_call.1} parent=11 // pred_fallthru
          _
        // Predicated region
        $region25: #{tpu_custom_call.1} parent=11 // pred_check
          %p262 = pneg %p128
        $region26: #{tpu_custom_call.1} parent=11 // pred_check_branch
          %264 = sbr.rel (%p262) target = $region28
        $region27: #{tpu_custom_call.1} parent=11 // pred_region
          _
        $region28: #{tpu_custom_call.1} parent=11 // pred_fallthru
          _
        // Predicated region
        $region29: #{tpu_custom_call.1} parent=11 // pred_check
          %p265 = pneg %p149
        $region30: #{tpu_custom_call.1} parent=11 // pred_check_branch
          %267 = sbr.rel (%p265) target = $region32
        $region31: #{tpu_custom_call.1} parent=11 // pred_region
          _
        $region32: #{tpu_custom_call.1} parent=11 // pred_fallthru
          _
        // Predicated region
        $region33: #{tpu_custom_call.1} parent=11 // pred_check
          %p268 = pneg %p170
        $region34: #{tpu_custom_call.1} parent=11 // pred_check_branch
          %270 = sbr.rel (%p268) target = $region36
        $region35: #{tpu_custom_call.1} parent=11 // pred_region
          _
        $region36: #{tpu_custom_call.1} parent=11 // pred_fallthru
          _
        // Predicated region
        $region37: #{tpu_custom_call.1} parent=11 // pred_check
          %p271 = pneg %p191
        $region38: #{tpu_custom_call.1} parent=11 // pred_check_branch
          %273 = sbr.rel (%p271) target = $region40
        $region39: #{tpu_custom_call.1} parent=11 // pred_region
          _
        $region40: #{tpu_custom_call.1} parent=11 // pred_fallthru
          _
        // Predicated region
        $region41: #{tpu_custom_call.1} parent=11 // pred_check
          %p274 = pneg %p212
        $region42: #{tpu_custom_call.1} parent=11 // pred_check_branch
          %276 = sbr.rel (%p274) target = $region44
        $region43: #{tpu_custom_call.1} parent=11 // pred_region
          _
        $region44: #{tpu_custom_call.1} parent=11 // pred_fallthru
          _
      $region12: #{tpu_custom_call.1} parent=5 // pred_fallthru
        _
      %p277 = scmp.lt.s32.totalorder %s18, 2
      // Predicated region
      $region45: #{tpu_custom_call.1} parent=5 // pred_check
        %p278 = pneg %p277
      $region46: #{tpu_custom_call.1} parent=5 // pred_check_branch
        %280 = sbr.rel (%p278) target = $region48
      $region47: #{tpu_custom_call.1} parent=5 // pred_region
        // Predicated region
        $region49: #{tpu_custom_call.1} parent=47 // pred_check
          %p281 = pneg %p38
        $region50: #{tpu_custom_call.1} parent=47 // pred_check_branch
          %283 = sbr.rel (%p281) target = $region52
        $region51: #{tpu_custom_call.1} parent=47 // pred_region
          %s284 = smul.u32 12, %s18
          %p285 = scmp.lt.s32.totalorder %s284, 23
          %s286 = scalar_select %p285, %s284, 23
          %s287 = smul.addr %s286, 4
          %s288 = scalar_lea.vmem %s0, %s287
          %s289 = smul.u32 12, %s18
        $region52: #{tpu_custom_call.1} parent=47 // pred_fallthru
          _
      $region48: #{tpu_custom_call.1} parent=5 // pred_fallthru
        _
      %p290 = scmp.le.s32.totalorder 1, %s18
      %p291 = scmp.lt.s32.totalorder %s18, 3
      %p292 = pnand %p290, %p291
      %p293 = pneg %p292
      // Predicated region
      $region53: #{tpu_custom_call.1} parent=5 // pred_check
        _
      $region54: #{tpu_custom_call.1} parent=5 // pred_check_branch
        %295 = sbr.rel (%p292) target = $region56
      $region55: #{tpu_custom_call.1} parent=5 // pred_region
        %s296 = ssub.s32 %s18, 1
        %s297 = smul.u32 12, %s23
        %p298 = scmp.lt.s32.totalorder %s297, 23
        %s299 = scalar_select %p298, %s297, 23
        %s300 = smul.addr %s299, 4
        %s301 = scalar_lea.vmem %s0, %s300
        %p302 = pneg %p44
        %p303 = pneg %p41
        %p304 = pneg %p65
        %p305 = pneg %p62
        %p306 = pneg %p86
        %p307 = pneg %p83
        %p308 = pneg %p107
        %p309 = pneg %p104
        %p310 = pneg %p128
        %p311 = pneg %p125
        %p312 = pneg %p149
        %p313 = pneg %p146
        %p314 = pneg %p170
        %p315 = pneg %p167
        %p316 = pneg %p191
        %p317 = pneg %p188
        %p318 = pneg %p212
        %p319 = pneg %p209
        %p320 = pneg %p238
        %p321 = pneg %p235
        %s322 = sand.u32 %s225, 1
        %s323 = scalar_lea.sflag [#allocation4], %s322
        %s324 = sand.u32 %s225, 1
        %s325 = smul.addr %s324, 24
        %s326 = scalar_lea.vmem [#allocation3], %s325
        %s327 = smul.u32 12, %s23
        %p328 = scmp.lt.s32.totalorder %s327, 23
        %s329 = scalar_select %p328, %s327, 23
        %s330 = smul.addr %s329, 4
        %s331 = scalar_lea.vmem %s0, %s330
        %s332 = smul.u32 12, %s23
        %vm334 = vcmask 125952
        %335 = vst.msk [vmem:[#allocation2] sm:$0xf] %vm334, 0
        %s336 = scalar_lea.vmem [#allocation2], 16
        %337 = vst.msk [vmem:[%s336] sm:$0xf] %vm334, 0
        %s338 = scalar_lea.vmem [#allocation2], 32
        %339 = vst.msk [vmem:[%s338] sm:$0xf] %vm334, 0
        %s340 = scalar_lea.vmem [#allocation2], 48
        %341 = vst.msk [vmem:[%s340] sm:$0xf] %vm334, 0
        %v342 = vld [vmem:[%s331] sm:$0xf]
        %v343 = vld [vmem:[%s331 + $0x4] sm:$0xf]
        %v344 = vld [vmem:[%s331 + $0x8] sm:$0xf]
        %v345 = vld [vmem:[%s331 + $0xc] sm:$0xf]
        %v346 = vld [vmem:[%s331 + $0x10] sm:$0xf]
        %v347 = vld [vmem:[%s331 + $0x14] sm:$0xf]
        %v348 = vld [vmem:[%s331 + $0x18] sm:$0xf]
        %v349 = vld [vmem:[%s331 + $0x1c] sm:$0xf]
        %v350 = vld [vmem:[%s331 + $0x20] sm:$0xf]
        %v351 = vld [vmem:[%s331 + $0x24] sm:$0xf]
        %v352 = vld [vmem:[%s331 + $0x28] sm:$0xf]
        %v353 = vld [vmem:[%s331 + $0x2c] sm:$0xf]
        %v354 = vld [vmem:[%s2] sm:$0xf]
        %v367 = vunpack.c.l.b16 %v342
        %v368 = vunpack.c.l.b16 %v343
        %v369 = vunpack.c.l.b16 %v344
        %v370 = vunpack.c.l.b16 %v345
        %v371 = vunpack.c.l.b16 %v346
        %v372 = vunpack.c.l.b16 %v347
        %v373 = vunpack.c.l.b16 %v348
        %v374 = vunpack.c.l.b16 %v349
        %v375 = vunpack.c.l.b16 %v350
        %v376 = vunpack.c.l.b16 %v351
        %v377 = vunpack.c.l.b16 %v352
        %v378 = vunpack.c.l.b16 %v353
        %v379 = vpack.c.b16 %v368, %v367
        %v380 = vpack.c.b16 %v370, %v369
        %v381 = vpack.c.b16 %v372, %v371
        %v382 = vpack.c.b16 %v374, %v373
        %v383 = vpack.c.b16 %v376, %v375
        %v384 = vpack.c.b16 %v378, %v377
        %vm385 = vcmask 64512
        %v387 = vsel %vm385, %v379, 0
        %v390 = vsel %vm385, %v380, 0
        %v393 = vsel %vm385, %v381, 0
        %v396 = vsel %vm385, %v382, 0
        %v399 = vsel %vm385, %v383, 0
        %v402 = vsel %vm385, %v384, 0
        %vm404 = vcmask 1043456
        %v406 = vsel %vm404, %v354, 0
        %408 = vmatpush.bf16.msra.mxu0 0
        %409 = vmatpush.bf16.msra.mxu0 0
        %410 = vmatpush.bf16.msra.mxu0 0
        %411 = vmatpush.bf16.msra.mxu0 0
        %412 = vmatpush.bf16.msra.mxu0 0
        %413 = vmatpush.bf16.msra.mxu0 0
        %414 = vmatpush.bf16.msra.mxu0 0
        %415 = vmatpush.bf16.msra.mxu0 %v406
        %416 = vmatmul.bf16.gmra.mxu0 %v387
        %v417 = vpop.f32.mrf.mxu0
        %v418 = vadd.f32 0.0, %v417
        %v419 = vpop.f32.mrf.mxu0
        %v420 = vadd.f32 0.0, %v419
        %421 = vmatmul.bf16.gmra.mxu0 %v390
        %v422 = vpop.f32.mrf.mxu0
        %v423 = vadd.f32 0.0, %v422
        %v424 = vpop.f32.mrf.mxu0
        %v425 = vadd.f32 0.0, %v424
        %426 = vmatmul.bf16.gmra.mxu0 %v393
        %v427 = vpop.f32.mrf.mxu0
        %v428 = vadd.f32 0.0, %v427
        %v429 = vpop.f32.mrf.mxu0
        %v430 = vadd.f32 0.0, %v429
        %431 = vmatmul.bf16.gmra.mxu0 %v396
        %v432 = vpop.f32.mrf.mxu0
        %v433 = vadd.f32 0.0, %v432
        %v434 = vpop.f32.mrf.mxu0
        %v435 = vadd.f32 0.0, %v434
        %436 = vmatmul.bf16.gmra.mxu0 %v399
        %v437 = vpop.f32.mrf.mxu0
        %v438 = vadd.f32 0.0, %v437
        %v439 = vpop.f32.mrf.mxu0
        %v440 = vadd.f32 0.0, %v439
        %441 = vmatmul.bf16.gmra.mxu0 %v402
        %v442 = vpop.f32.mrf.mxu0
        %v443 = vadd.f32 0.0, %v442
        %v444 = vpop.f32.mrf.mxu0
        %v445 = vadd.f32 0.0, %v444
        %446 = vdwg.mxu0
        %v447 = vld [vmem:[%s5] sm:$0x1]
        %v449 = vperm.slane %v447, 0
        %v451 = vadd.f32 %v418, %v449
        %v452 = vadd.f32 %v420, %v449
        %v453 = vadd.f32 %v423, %v449
        %v454 = vadd.f32 %v425, %v449
        %v455 = vadd.f32 %v428, %v449
        %v456 = vadd.f32 %v430, %v449
        %v457 = vadd.f32 %v433, %v449
        %v458 = vadd.f32 %v435, %v449
        %v459 = vadd.f32 %v438, %v449
        %v460 = vadd.f32 %v440, %v449
        %v461 = vadd.f32 %v443, %v449
        %v462 = vadd.f32 %v445, %v449
        %v463 = vmax.f32 %v451, 0.0
        %v464 = vmax.f32 %v452, 0.0
        %v465 = vmax.f32 %v453, 0.0
        %v466 = vmax.f32 %v454, 0.0
        %v467 = vmax.f32 %v455, 0.0
        %v468 = vmax.f32 %v456, 0.0
        %v469 = vmax.f32 %v457, 0.0
        %v470 = vmax.f32 %v458, 0.0
        %v471 = vmax.f32 %v459, 0.0
        %v472 = vmax.f32 %v460, 0.0
        %v473 = vmax.f32 %v461, 0.0
        %v474 = vmax.f32 %v462, 0.0
        %v475 = vld [vmem:[%s1] sm:$0xff]
        %v476 = vld [vmem:[%s1 + $0x8] sm:$0xff]
        %v477 = vld [vmem:[%s1 + $0x10] sm:$0xff]
        %v478 = vld [vmem:[%s1 + $0x18] sm:$0xff]
        %v479 = vld [vmem:[%s1 + $0x20] sm:$0xff]
        %v480 = vld [vmem:[%s1 + $0x28] sm:$0xff]
        %v481 = vld [vmem:[%s1 + $0x30] sm:$0xff]
        %v482 = vld [vmem:[%s1 + $0x38] sm:$0xff]
        %v483 = vld [vmem:[%s1 + $0x40] sm:$0xff]
        %v484 = vld [vmem:[%s1 + $0x48] sm:$0xff]
        %v485 = vld [vmem:[%s1 + $0x50] sm:$0xff]
        %v486 = vld [vmem:[%s1 + $0x58] sm:$0xff]
        %488 = vset.pattern.permute.xlu0 0
        %489 = vperm.xlu0 %488, %v475
        %v490 = vpop.permute.xlu0 %489
        %493 = vset.pattern.permute.xlu0 0
        %494 = vperm.xlu0 %493, %v476
        %v495 = vpop.permute.xlu0 %494
        %498 = vset.pattern.permute.xlu0 0
        %499 = vperm.xlu0 %498, %v477
        %v500 = vpop.permute.xlu0 %499
        %503 = vset.pattern.permute.xlu0 0
        %504 = vperm.xlu0 %503, %v478
        %v505 = vpop.permute.xlu0 %504
        %508 = vset.pattern.permute.xlu0 0
        %509 = vperm.xlu0 %508, %v479
        %v510 = vpop.permute.xlu0 %509
        %513 = vset.pattern.permute.xlu0 0
        %514 = vperm.xlu0 %513, %v480
        %v515 = vpop.permute.xlu0 %514
        %518 = vset.pattern.permute.xlu0 0
        %519 = vperm.xlu0 %518, %v481
        %v520 = vpop.permute.xlu0 %519
        %523 = vset.pattern.permute.xlu0 0
        %524 = vperm.xlu0 %523, %v482
        %v525 = vpop.permute.xlu0 %524
        %528 = vset.pattern.permute.xlu0 0
        %529 = vperm.xlu0 %528, %v483
        %v530 = vpop.permute.xlu0 %529
        %533 = vset.pattern.permute.xlu0 0
        %534 = vperm.xlu0 %533, %v484
        %v535 = vpop.permute.xlu0 %534
        %538 = vset.pattern.permute.xlu0 0
        %539 = vperm.xlu0 %538, %v485
        %v540 = vpop.permute.xlu0 %539
        %543 = vset.pattern.permute.xlu0 0
        %544 = vperm.xlu0 %543, %v486
        %v545 = vpop.permute.xlu0 %544
        %v547 = vmul.f32 %v463, %v490
        %v548 = vmul.f32 %v464, %v495
        %v549 = vmul.f32 %v465, %v500
        %v550 = vmul.f32 %v466, %v505
        %v551 = vmul.f32 %v467, %v510
        %v552 = vmul.f32 %v468, %v515
        %v553 = vmul.f32 %v469, %v520
        %v554 = vmul.f32 %v470, %v525
        %v555 = vmul.f32 %v471, %v530
        %v556 = vmul.f32 %v472, %v535
        %v557 = vmul.f32 %v473, %v540
        %v558 = vmul.f32 %v474, %v545
        %v559 = vpack.c.bf16 %v547, %v547
        %v560 = vpack.c.bf16 %v548, %v548
        %v561 = vpack.c.bf16 %v549, %v549
        %v562 = vpack.c.bf16 %v550, %v550
        %v563 = vpack.c.bf16 %v551, %v551
        %v564 = vpack.c.bf16 %v552, %v552
        %v565 = vpack.c.bf16 %v553, %v553
        %v566 = vpack.c.bf16 %v554, %v554
        %v567 = vpack.c.bf16 %v555, %v555
        %v568 = vpack.c.bf16 %v556, %v556
        %v569 = vpack.c.bf16 %v557, %v557
        %v570 = vpack.c.bf16 %v558, %v558
        %571 = vst.msk [vmem:[#allocation2 + $0x4] sm:$0xf] %vm334, %v559
        %572 = vst.msk [vmem:[#allocation2 + $0x8] sm:$0xf] %vm334, %v560
        %573 = vst.msk [vmem:[#allocation2 + $0xc] sm:$0xf] %vm334, %v561
        %574 = vst.msk [vmem:[%s336 + $0x4] sm:$0xf] %vm334, %v562
        %575 = vst.msk [vmem:[%s336 + $0x8] sm:$0xf] %vm334, %v563
        %576 = vst.msk [vmem:[%s336 + $0xc] sm:$0xf] %vm334, %v564
        %577 = vst.msk [vmem:[%s338 + $0x4] sm:$0xf] %vm334, %v565
        %578 = vst.msk [vmem:[%s338 + $0x8] sm:$0xf] %vm334, %v566
        %579 = vst.msk [vmem:[%s338 + $0xc] sm:$0xf] %vm334, %v567
        %580 = vst.msk [vmem:[%s340 + $0x4] sm:$0xf] %vm334, %v568
        %581 = vst.msk [vmem:[%s340 + $0x8] sm:$0xf] %vm334, %v569
        %582 = vst.msk [vmem:[%s340 + $0xc] sm:$0xf] %vm334, %v570
        %v583 = vld [vmem:[%s7] sm:$0x1]
        %v585 = vperm.slane %v583, 0
        %586 = vrot.lane.b32.xlu0 %v585, 16
        %v587 = vpop.permute.xlu0 %586
        %v589 = vadd.f32 %v418, %v587
        %v590 = vadd.f32 %v420, %v587
        %v591 = vadd.f32 %v423, %v587
        %v592 = vld [vmem:[%s340] sm:$0xf]
        %v593 = vld [vmem:[%s340 + $0x4] sm:$0xf]
        %v594 = vld [vmem:[%s340 + $0x8] sm:$0xf]
        %v595 = vld [vmem:[%s340 + $0xc] sm:$0x1]
        %v596 = vld [vmem:[%s3] sm:$0xf]
        %v597 = vld [vmem:[%s3 + $0x4] sm:$0xf]
        %v598 = vld [vmem:[%s338] sm:$0xe]
        %v599 = vld [vmem:[%s338 + $0x4] sm:$0xf]
        %v600 = vld [vmem:[%s338 + $0x8] sm:$0xf]
        %v601 = vld [vmem:[%s338 + $0xc] sm:$0x1]
        %s602 = scalar_lea.vmem %s3, 8
        %v603 = vld [vmem:[%s602] sm:$0xf]
        %v604 = vld [vmem:[%s602 + $0x4] sm:$0xf]
        %v609 = vunpack.c.l.b16 %v598
        %v610 = vunpack.c.l.b16 %v599
        %v611 = vunpack.c.l.b16 %v600
        %v612 = vunpack.c.l.b16 %v601
        %v613 = vpack.c.b16 %v610, %v609
        %v614 = vpack.c.b16 %v612, %v611
        %vm615 = vcmask 1046528
        %v616 = vrot.slane %v613, 1
        %v617 = vrot.slane %v614, 1
        %v618 = vsel %vm615, %v616, %v617
        %v621 = vunpack.c.l.b16 %v603
        %v622 = vunpack.c.l.b16 %v604
        %v623 = vpack.c.b16 %v622, %v621
        %vm625 = vcmask 130048
        %v627 = vsel %vm625, %v618, 0
        %v630 = vsel %vm625, %v617, 0
        %632 = vmatpush.bf16.msra.mxu0 0
        %633 = vmatpush.bf16.msra.mxu0 0
        %634 = vmatpush.bf16.msra.mxu0 0
        %635 = vmatpush.bf16.msra.mxu0 0
        %636 = vmatpush.bf16.msra.mxu0 0
        %637 = vmatpush.bf16.msra.mxu0 0
        %638 = vmatpush.bf16.msra.mxu0 0
        %639 = vmatpush.bf16.msra.mxu0 %v623
        %640 = vmatmul.bf16.gmra.mxu0 %v627
        %v641 = vpop.f32.mrf.mxu0
        %v642 = vadd.f32 0.0, %v641
        %v643 = vpop.f32.mrf.mxu0
        %v644 = vadd.f32 0.0, %v643
        %645 = vmatmul.bf16.gmra.mxu0 %v630
        %v646 = vpop.f32.mrf.mxu0
        %v647 = vadd.f32 0.0, %v646
        %v648 = vpop.f32.mrf.mxu0
        %649 = vdwg.mxu0
        %v654 = vunpack.c.l.b16 %v592
        %v655 = vunpack.c.l.b16 %v593
        %v656 = vunpack.c.l.b16 %v594
        %v657 = vunpack.c.l.b16 %v595
        %v658 = vpack.c.b16 %v655, %v654
        %v659 = vpack.c.b16 %v657, %v656
        %vm660 = vsmask.f32 7424
        %v662 = vshrl.u32 %v658, 16
        %v664 = vshll.u32 %v658, 16
        %v666 = vrot.slane %v664, 1
        %v667 = vor.u32 %v662, %v666
        %v669 = vshll.u32 %v659, 16
        %v671 = vrot.slane %v669, 1
        %v672 = vsel %vm660, %v667, %v671
        %v673 = vshrl.u32 %v659, 16
        %v675 = vor.u32 %v673, %v671
        %v678 = vunpack.c.l.b16 %v596
        %v679 = vunpack.c.l.b16 %v597
        %v680 = vpack.c.b16 %v679, %v678
        %v683 = vsel %vm625, %v672, 0
        %v686 = vsel %vm625, %v675, 0
        %688 = vmatpush.bf16.msra.mxu0 0
        %689 = vmatpush.bf16.msra.mxu0 0
        %690 = vmatpush.bf16.msra.mxu0 0
        %691 = vmatpush.bf16.msra.mxu0 0
        %692 = vmatpush.bf16.msra.mxu0 0
        %693 = vmatpush.bf16.msra.mxu0 0
        %694 = vmatpush.bf16.msra.mxu0 0
        %695 = vmatpush.bf16.msra.mxu0 %v680
        %696 = vmatmul.bf16.gmra.mxu0 %v683
        %v697 = vpop.f32.mrf.mxu0
        %v698 = vadd.f32 %v642, %v697
        %v699 = vpop.f32.mrf.mxu0
        %v700 = vadd.f32 %v644, %v699
        %701 = vmatmul.bf16.gmra.mxu0 %v686
        %v702 = vpop.f32.mrf.mxu0
        %v703 = vadd.f32 %v647, %v702
        %v704 = vpop.f32.mrf.mxu0
        %705 = vdwg.mxu0
        %v706 = vld [vmem:[%s340] sm:$0xe]
        %s707 = scalar_lea.vmem %s3, 16
        %v708 = vld [vmem:[%s707] sm:$0xf]
        %v709 = vld [vmem:[%s707 + $0x4] sm:$0xf]
        %v711 = vunpack.c.l.b16 %v706
        %v712 = vpack.c.b16 %v655, %v711
        %v713 = vrot.slane %v712, 1
        %v714 = vrot.slane %v659, 1
        %v715 = vsel %vm615, %v713, %v714
        %v718 = vunpack.c.l.b16 %v708
        %v719 = vunpack.c.l.b16 %v709
        %v720 = vpack.c.b16 %v719, %v718
        %v723 = vsel %vm625, %v715, 0
        %v726 = vsel %vm625, %v714, 0
        %728 = vmatpush.bf16.msra.mxu0 0
        %729 = vmatpush.bf16.msra.mxu0 0
        %730 = vmatpush.bf16.msra.mxu0 0
        %731 = vmatpush.bf16.msra.mxu0 0
        %732 = vmatpush.bf16.msra.mxu0 0
        %733 = vmatpush.bf16.msra.mxu0 0
        %734 = vmatpush.bf16.msra.mxu0 0
        %735 = vmatpush.bf16.msra.mxu0 %v720
        %736 = vmatmul.bf16.gmra.mxu0 %v723
        %v737 = vpop.f32.mrf.mxu0
        %v738 = vadd.f32 0.0, %v737
        %v739 = vpop.f32.mrf.mxu0
        %v740 = vadd.f32 0.0, %v739
        %741 = vmatmul.bf16.gmra.mxu0 %v726
        %v742 = vpop.f32.mrf.mxu0
        %v743 = vadd.f32 0.0, %v742
        %v744 = vpop.f32.mrf.mxu0
        %745 = vdwg.mxu0
        %v746 = vadd.f32 %v698, %v738
        %v747 = vadd.f32 %v700, %v740
        %v748 = vadd.f32 %v703, %v743
        %v749 = vld [vmem:[%s336] sm:$0x8]
        %v750 = vld [vmem:[%s336 + $0x4] sm:$0xf]
        %v751 = vld [vmem:[%s336 + $0x8] sm:$0xf]
        %v752 = vld [vmem:[%s336 + $0xc] sm:$0xf]
        %s753 = scalar_lea.vmem %s3, 24
        %v754 = vld [vmem:[%s753] sm:$0xf]
        %v755 = vld [vmem:[%s753 + $0x4] sm:$0xf]
        %v760 = vunpack.c.l.b16 %v749
        %v761 = vunpack.c.l.b16 %v750
        %v762 = vunpack.c.l.b16 %v751
        %v763 = vunpack.c.l.b16 %v752
        %v764 = vpack.c.b16 %v761, %v760
        %v765 = vpack.c.b16 %v763, %v762
        %vm766 = vsmask.f32 4352
        %v768 = vshrl.u32 %v764, 16
        %v770 = vrot.slane %v768, 3
        %v771 = vshll.u32 %v764, 16
        %v773 = vrot.slane %v771, 4
        %v774 = vor.u32 %v770, %v773
        %v776 = vshrl.u32 %v765, 16
        %v778 = vrot.slane %v776, 3
        %v779 = vshll.u32 %v765, 16
        %v781 = vrot.slane %v779, 4
        %v782 = vor.u32 %v778, %v781
        %v783 = vsel %vm766, %v774, %v782
        %v786 = vunpack.c.l.b16 %v754
        %v787 = vunpack.c.l.b16 %v755
        %v788 = vpack.c.b16 %v787, %v786
        %v791 = vsel %vm625, %v783, 0
        %v794 = vsel %vm625, %v782, 0
        %796 = vmatpush.bf16.msra.mxu0 0
        %797 = vmatpush.bf16.msra.mxu0 0
        %798 = vmatpush.bf16.msra.mxu0 0
        %799 = vmatpush.bf16.msra.mxu0 0
        %800 = vmatpush.bf16.msra.mxu0 0
        %801 = vmatpush.bf16.msra.mxu0 0
        %802 = vmatpush.bf16.msra.mxu0 0
        %803 = vmatpush.bf16.msra.mxu0 %v788
        %804 = vmatmul.bf16.gmra.mxu0 %v791
        %v805 = vpop.f32.mrf.mxu0
        %v806 = vadd.f32 0.0, %v805
        %v807 = vpop.f32.mrf.mxu0
        %v808 = vadd.f32 0.0, %v807
        %809 = vmatmul.bf16.gmra.mxu0 %v794
        %v810 = vpop.f32.mrf.mxu0
        %v811 = vadd.f32 0.0, %v810
        %v812 = vpop.f32.mrf.mxu0
        %813 = vdwg.mxu0
        %v814 = vadd.f32 %v746, %v806
        %v815 = vadd.f32 %v747, %v808
        %v816 = vadd.f32 %v748, %v811
        %v817 = vld [vmem:[#allocation2 + $0x4] sm:$0xf]
        %v818 = vld [vmem:[#allocation2 + $0x8] sm:$0xf]
        %v819 = vld [vmem:[#allocation2 + $0xc] sm:$0xf]
        %s820 = scalar_lea.vmem %s3, 32
        %v821 = vld [vmem:[%s820] sm:$0xf]
        %v822 = vld [vmem:[%s820 + $0x4] sm:$0xf]
        %v826 = vunpack.c.l.b16 %v817
        %v827 = vunpack.c.l.b16 %v818
        %v828 = vunpack.c.l.b16 %v819
        %v829 = vpack.c.b16 %v827, %v826
        %v830 = vpack.c.b16 %v828, %v828
        %v833 = vunpack.c.l.b16 %v821
        %v834 = vunpack.c.l.b16 %v822
        %v835 = vpack.c.b16 %v834, %v833
        %v838 = vsel %vm625, %v829, 0
        %v841 = vsel %vm625, %v830, 0
        %843 = vmatpush.bf16.msra.mxu0 0
        %844 = vmatpush.bf16.msra.mxu0 0
        %845 = vmatpush.bf16.msra.mxu0 0
        %846 = vmatpush.bf16.msra.mxu0 0
        %847 = vmatpush.bf16.msra.mxu0 0
        %848 = vmatpush.bf16.msra.mxu0 0
        %849 = vmatpush.bf16.msra.mxu0 0
        %850 = vmatpush.bf16.msra.mxu0 %v835
        %851 = vmatmul.bf16.gmra.mxu0 %v838
        %v852 = vpop.f32.mrf.mxu0
        %v853 = vadd.f32 0.0, %v852
        %v854 = vpop.f32.mrf.mxu0
        %v855 = vadd.f32 0.0, %v854
        %856 = vmatmul.bf16.gmra.mxu0 %v841
        %v857 = vpop.f32.mrf.mxu0
        %v858 = vadd.f32 0.0, %v857
        %v859 = vpop.f32.mrf.mxu0
        %860 = vdwg.mxu0
        %v861 = vadd.f32 %v814, %v853
        %v862 = vadd.f32 %v815, %v855
        %v863 = vadd.f32 %v816, %v858
        %s864 = scalar_lea.vmem %s3, 40
        %v865 = vld [vmem:[%s864] sm:$0xf]
        %v866 = vld [vmem:[%s864 + $0x4] sm:$0xf]
        %v867 = vpack.c.b16 %v762, %v761
        %v868 = vpack.c.b16 %v763, %v763
        %v871 = vunpack.c.l.b16 %v865
        %v872 = vunpack.c.l.b16 %v866
        %v873 = vpack.c.b16 %v872, %v871
        %v876 = vsel %vm625, %v867, 0
        %v879 = vsel %vm625, %v868, 0
        %881 = vmatpush.bf16.msra.mxu0 0
        %882 = vmatpush.bf16.msra.mxu0 0
        %883 = vmatpush.bf16.msra.mxu0 0
        %884 = vmatpush.bf16.msra.mxu0 0
        %885 = vmatpush.bf16.msra.mxu0 0
        %886 = vmatpush.bf16.msra.mxu0 0
        %887 = vmatpush.bf16.msra.mxu0 0
        %888 = vmatpush.bf16.msra.mxu0 %v873
        %889 = vmatmul.bf16.gmra.mxu0 %v876
        %v890 = vpop.f32.mrf.mxu0
        %v891 = vadd.f32 0.0, %v890
        %v892 = vpop.f32.mrf.mxu0
        %v893 = vadd.f32 0.0, %v892
        %894 = vmatmul.bf16.gmra.mxu0 %v879
        %v895 = vpop.f32.mrf.mxu0
        %v896 = vadd.f32 0.0, %v895
        %v897 = vpop.f32.mrf.mxu0
        %898 = vdwg.mxu0
        %v899 = vadd.f32 %v861, %v891
        %v900 = vadd.f32 %v862, %v893
        %v901 = vadd.f32 %v863, %v896
        %v902 = vld [vmem:[%s340] sm:$0x8]
        %v903 = vld [vmem:[%s340 + $0xc] sm:$0xf]
        %s904 = scalar_lea.vmem %s3, 48
        %v905 = vld [vmem:[%s904] sm:$0xf]
        %v906 = vld [vmem:[%s904 + $0x4] sm:$0xf]
        %v909 = vunpack.c.l.b16 %v902
        %v910 = vunpack.c.l.b16 %v903
        %v911 = vpack.c.b16 %v655, %v909
        %v912 = vpack.c.b16 %v910, %v656
        %v914 = vshrl.u32 %v911, 16
        %v916 = vrot.slane %v914, 3
        %v917 = vshll.u32 %v911, 16
        %v919 = vrot.slane %v917, 4
        %v920 = vor.u32 %v916, %v919
        %v922 = vshrl.u32 %v912, 16
        %v924 = vrot.slane %v922, 3
        %v925 = vshll.u32 %v912, 16
        %v927 = vrot.slane %v925, 4
        %v928 = vor.u32 %v924, %v927
        %v929 = vsel %vm766, %v920, %v928
        %v932 = vunpack.c.l.b16 %v905
        %v933 = vunpack.c.l.b16 %v906
        %v934 = vpack.c.b16 %v933, %v932
        %v937 = vsel %vm625, %v929, 0
        %v940 = vsel %vm625, %v928, 0
        %942 = vmatpush.bf16.msra.mxu0 0
        %943 = vmatpush.bf16.msra.mxu0 0
        %944 = vmatpush.bf16.msra.mxu0 0
        %945 = vmatpush.bf16.msra.mxu0 0
        %946 = vmatpush.bf16.msra.mxu0 0
        %947 = vmatpush.bf16.msra.mxu0 0
        %948 = vmatpush.bf16.msra.mxu0 0
        %949 = vmatpush.bf16.msra.mxu0 %v934
        %950 = vmatmul.bf16.gmra.mxu0 %v937
        %v951 = vpop.f32.mrf.mxu0
        %v952 = vadd.f32 0.0, %v951
        %v953 = vpop.f32.mrf.mxu0
        %v954 = vadd.f32 0.0, %v953
        %955 = vmatmul.bf16.gmra.mxu0 %v940
        %v956 = vpop.f32.mrf.mxu0
        %v957 = vadd.f32 0.0, %v956
        %v958 = vpop.f32.mrf.mxu0
        %959 = vdwg.mxu0
        %v960 = vadd.f32 %v899, %v952
        %v961 = vadd.f32 %v900, %v954
        %v962 = vadd.f32 %v901, %v957
        %v963 = vld [vmem:[%s338 + $0xc] sm:$0xf]
        %s964 = scalar_lea.vmem %s3, 56
        %v965 = vld [vmem:[%s964] sm:$0xf]
        %v966 = vld [vmem:[%s964 + $0x4] sm:$0xf]
        %v968 = vunpack.c.l.b16 %v963
        %v969 = vpack.c.b16 %v611, %v610
        %v970 = vpack.c.b16 %v968, %v968
        %v973 = vunpack.c.l.b16 %v965
        %v974 = vunpack.c.l.b16 %v966
        %v975 = vpack.c.b16 %v974, %v973
        %v978 = vsel %vm625, %v969, 0
        %v981 = vsel %vm625, %v970, 0
        %983 = vmatpush.bf16.msra.mxu0 0
        %984 = vmatpush.bf16.msra.mxu0 0
        %985 = vmatpush.bf16.msra.mxu0 0
        %986 = vmatpush.bf16.msra.mxu0 0
        %987 = vmatpush.bf16.msra.mxu0 0
        %988 = vmatpush.bf16.msra.mxu0 0
        %989 = vmatpush.bf16.msra.mxu0 0
        %990 = vmatpush.bf16.msra.mxu0 %v975
        %991 = vmatmul.bf16.gmra.mxu0 %v978
        %v992 = vpop.f32.mrf.mxu0
        %v993 = vadd.f32 0.0, %v992
        %v994 = vpop.f32.mrf.mxu0
        %v995 = vadd.f32 0.0, %v994
        %996 = vmatmul.bf16.gmra.mxu0 %v981
        %v997 = vpop.f32.mrf.mxu0
        %v998 = vadd.f32 0.0, %v997
        %v999 = vpop.f32.mrf.mxu0
        %1000 = vdwg.mxu0
        %v1001 = vadd.f32 %v960, %v993
        %v1002 = vadd.f32 %v961, %v995
        %v1003 = vadd.f32 %v962, %v998
        %s1004 = scalar_lea.vmem %s3, 64
        %v1005 = vld [vmem:[%s1004] sm:$0xf]
        %v1006 = vld [vmem:[%s1004 + $0x4] sm:$0xf]
        %v1007 = vpack.c.b16 %v656, %v655
        %v1008 = vpack.c.b16 %v910, %v910
        %v1011 = vunpack.c.l.b16 %v1005
        %v1012 = vunpack.c.l.b16 %v1006
        %v1013 = vpack.c.b16 %v1012, %v1011
        %v1016 = vsel %vm625, %v1007, 0
        %v1019 = vsel %vm625, %v1008, 0
        %1021 = vmatpush.bf16.msra.mxu0 0
        %1022 = vmatpush.bf16.msra.mxu0 0
        %1023 = vmatpush.bf16.msra.mxu0 0
        %1024 = vmatpush.bf16.msra.mxu0 0
        %1025 = vmatpush.bf16.msra.mxu0 0
        %1026 = vmatpush.bf16.msra.mxu0 0
        %1027 = vmatpush.bf16.msra.mxu0 0
        %1028 = vmatpush.bf16.msra.mxu0 %v1013
        %1029 = vmatmul.bf16.gmra.mxu0 %v1016
        %v1030 = vpop.f32.mrf.mxu0
        %v1031 = vadd.f32 0.0, %v1030
        %v1032 = vpop.f32.mrf.mxu0
        %v1033 = vadd.f32 0.0, %v1032
        %1034 = vmatmul.bf16.gmra.mxu0 %v1019
        %v1035 = vpop.f32.mrf.mxu0
        %v1036 = vadd.f32 0.0, %v1035
        %v1037 = vpop.f32.mrf.mxu0
        %1038 = vdwg.mxu0
        %v1039 = vadd.f32 %v1001, %v1031
        %v1040 = vadd.f32 %v1002, %v1033
        %v1041 = vadd.f32 %v1003, %v1036
        %v1042 = vld [vmem:[%s6] sm:$0x1]
        %v1044 = vperm.slane %v1042, 0
        %v1046 = vadd.f32 %v1039, %v1044
        %v1047 = vadd.f32 %v1040, %v1044
        %v1048 = vadd.f32 %v1041, %v1044
        %v1049 = vmax.f32 %v1046, 0.0
        %v1050 = vmax.f32 %v1047, 0.0
        %v1051 = vmax.f32 %v1048, 0.0
        %v1052 = vpack.c.bf16 %v1050, %v1049
        %v1053 = vpack.c.bf16 %v1051, %v1051
        %v1054 = vld [vmem:[%s4] sm:$0xf]
        %v1055 = vld [vmem:[%s4 + $0x4] sm:$0xf]
        %v1056 = vld [vmem:[%s8] sm:$0x1]
        %v1058 = vperm.slane %v1056, 0
        %v1062 = vunpack.c.l.b16 %v1054
        %v1063 = vunpack.c.l.b16 %v1055
        %v1064 = vpack.c.b16 %v1063, %v1062
        %v1067 = vsel %vm625, %v1052, 0
        %v1070 = vsel %vm625, %v1053, 0
        %1072 = vmatpush.bf16.msra.mxu0 0
        %1073 = vmatpush.bf16.msra.mxu0 0
        %1074 = vmatpush.bf16.msra.mxu0 0
        %1075 = vmatpush.bf16.msra.mxu0 0
        %1076 = vmatpush.bf16.msra.mxu0 0
        %1077 = vmatpush.bf16.msra.mxu0 0
        %1078 = vmatpush.bf16.msra.mxu0 0
        %1079 = vmatpush.bf16.msra.mxu0 %v1064
        %1080 = vmatmul.bf16.gmra.mxu0 %v1067
        %v1081 = vpop.f32.mrf.mxu0
        %v1082 = vadd.f32 %v1058, %v1081
        %v1083 = vpop.f32.mrf.mxu0
        %v1084 = vadd.f32 %v1058, %v1083
        %1085 = vmatmul.bf16.gmra.mxu0 %v1070
        %v1086 = vpop.f32.mrf.mxu0
        %v1087 = vadd.f32 %v1058, %v1086
        %v1088 = vpop.f32.mrf.mxu0
        %1089 = vdwg.mxu0
        %1093 = vrot.lane.b32.xlu0 %v589, 112
        %v1094 = vpop.permute.xlu0 %1093
        %1095 = vrot.lane.b32.xlu0 %v590, 112
        %v1096 = vpop.permute.xlu0 %1095
        %1097 = vrot.lane.b32.xlu0 %v591, 112
        %v1098 = vpop.permute.xlu0 %1097
        %v1102 = vadd.f32 %v1082, %v1094
        %v1103 = vadd.f32 %v1084, %v1096
        %v1104 = vadd.f32 %v1087, %v1098
        %v1105 = vmax.f32 %v1102, 0.0
        %v1106 = vmax.f32 %v1103, 0.0
        %v1107 = vmax.f32 %v1104, 0.0
        %vm1108 = vcmask 261120
        %1109 = vst.msk [vmem:[%s326] sm:$0xff] %vm1108, %v1105
        %1110 = vst.msk [vmem:[%s326 + $0x8] sm:$0xff] %vm1108, %v1106
        %1111 = vst.msk [vmem:[%s326 + $0x10] sm:$0xff] %vm1108, %v1107
        %s1112 = sand.u32 %s225, 1
        %s1113 = scalar_lea.sflag [#allocation4], %s1112
        %s1114 = sand.u32 %s225, 1
        %s1115 = smul.addr %s1114, 24
        %s1116 = scalar_lea.vmem [#allocation3], %s1115
        // Predicated region
        $region57: #{tpu_custom_call.1} parent=55 // pred_check
          %p1117 = pneg %p235
        $region58: #{tpu_custom_call.1} parent=55 // pred_check_branch
          %1119 = sbr.rel (%p1117) target = $region60
        $region59: #{tpu_custom_call.1} parent=55 // pred_region
          %1121 = vsyncadd %s1113, 0
          %s1122 = smul.addr %s23, 3
          %s1123 = smul.addr %s1122, 8
          %s1124 = scalar_lea.hbm %s9, %s1123
          %s1125 = sshll.u32 %s1116, 4
          %s1126 = int_to_ptr.vmem [resolvable:$true] %s1125
          %s1127 = sshll.u32 %s1124, 4
          %s1128 = int_to_ptr.hbm [resolvable:$true] %s1127
          %1133 = dma.vmem_to_hbm [thread:$0]  %s1126, 384, %s1128, %s1113, 128, 128, 8
        $region60: #{tpu_custom_call.1} parent=55 // pred_fallthru
          _
      $region56: #{tpu_custom_call.1} parent=5 // pred_fallthru
        _
      %p1134 = scmp.le.s32.totalorder 2, %s18
      // Predicated region
      $region61: #{tpu_custom_call.1} parent=5 // pred_check
        %p1135 = pneg %p1134
      $region62: #{tpu_custom_call.1} parent=5 // pred_check_branch
        %1137 = sbr.rel (%p1135) target = $region64
      $region63: #{tpu_custom_call.1} parent=5 // pred_region
        %s1138 = ssub.s32 %s18, 2
        // Predicated region
        $region65: #{tpu_custom_call.1} parent=63 // pred_check
          %p1139 = pneg %p241
        $region66: #{tpu_custom_call.1} parent=63 // pred_check_branch
          %1141 = sbr.rel (%p1139) target = $region68
        $region67: #{tpu_custom_call.1} parent=63 // pred_region
          %s1142 = sand.u32 %s226, 1
          %s1143 = scalar_lea.sflag [#allocation4], %s1142
          %s1144 = sand.u32 %s226, 1
          %s1145 = smul.addr %s1144, 24
          %s1146 = scalar_lea.vmem [#allocation3], %s1145
          %1148 = dma.done %s1143, 384
        $region68: #{tpu_custom_call.1} parent=63 // pred_fallthru
          _
      $region64: #{tpu_custom_call.1} parent=5 // pred_fallthru
        _
    $region6: #{tpu_custom_call.1} parent=1 // loop_footer
      %s22 = sadd.s32 1, %s18
    $region7: #{tpu_custom_call.1} parent=1 // loop_footer_branch
      %17 = sbr.rel target = $region3
    $region8: #{tpu_custom_call.1} parent=1 // loop_exit
      _
    %1149 = vsyncpa [#allocation4], 1
    %s1150 = scalar_lea.sflag [#allocation4], 1
    %1151 = vsyncpa %s1150, 1

</llo_original>
